<compile_context>
chip_gen: v5e
topology: v5e:2x2
jax: 0.10.0
libtpu: 0.0.40
codegen_flags: <defaults>
</compile_context>

<pallas_src>
import jax
import jax.numpy as jnp
from jax.experimental import pallas as pl
from jax.experimental.pallas import tpu as pltpu

# ---------------- config (small, consistent with the module) ----------------
B = 8            # batch (>= 8 fills f32 sublanes)
L = 8            # feat_len
F = 16           # feat_size
E = 32           # embedding_size
H = 32           # hidden_size
A = 16           # attn_size (bottleneck)
V = 40           # output_size (vocab)
T = 6            # fused teacher-forced decode steps
GATES = 4 * H    # 128 -> exactly one f32 vreg lane width


def decoder_step_kernel(
    # per-step input (leading time dim squeezed by BlockSpec)
    emb_ref,       # (B, E)        embedded token for step t
    # step-invariant inputs (resident in VMEM across the whole grid)
    h0_ref,        # (B, H)        initial hidden (== get_last_hidden, 1 layer/1 dir)
    c0_ref,        # (B, H)        initial cell
    feats_ref,     # (B, L, F)
    uv_ref,        # (B, L, A)     hoisted  U @ feats + b_att
    w_att_h_ref,   # (H, A)  bf16  attention W (hidden -> bottleneck), transposed
    w_att_v_ref,   # (1, A)  f32   attention scoring vector
    w_gate_ref,    # (E+F+H, 4H) bf16  merged [W_ih_emb; W_ih_feat; W_hh]^T
    b_gate_ref,    # (1, 4H) f32   b_ih + b_hh
    w_out_ref,     # (H, V)  bf16  output projection, transposed
    b_out_ref,     # (1, V)  f32
    # outputs
    logp_ref,      # (B, V)        per-step log-softmax (time dim squeezed)
    attnw_ref,     # (B, L)        per-step attention weights
    hT_ref,        # (B, H)        final hidden
    cT_ref,        # (B, H)        final cell
    # scratch: recurrent state carried across grid steps
    h_sc, c_sc,    # (B, H) f32
):
    t = pl.program_id(0)

    @pl.when(t == 0)
    def _init():
        h_sc[...] = h0_ref[...]
        c_sc[...] = c0_ref[...]

    h = h_sc[...]
    c = c_sc[...]
    emb = emb_ref[...]
    feats = feats_ref[...]

    # ---------- temporal attention: score_t = w^T tanh(W h + U v_t + b) ----------
    wh = jnp.dot(h.astype(jnp.bfloat16), w_att_h_ref[...],
                 preferred_element_type=jnp.float32)                       # (B, A)
    e = jnp.tanh(uv_ref[...] + wh[:, None, :])                             # (B, L, A)
    scores = jnp.sum(e * w_att_v_ref[...][None, :, :], axis=-1)            # (B, L)
    m = jnp.max(scores, axis=-1, keepdims=True)
    ex = jnp.exp(scores - m)
    inv = pl.reciprocal(jnp.sum(ex, axis=-1, keepdims=True), approx=True)
    wts = ex * inv                                                         # (B, L)
    attnw_ref[...] = wts
    ctx = jnp.sum(feats * wts[:, :, None], axis=1)                         # (B, F)

    # ---------- LSTM cell (seq_len = 1) with a single merged input matmul ----------
    x = jnp.concatenate([emb, ctx, h], axis=-1)                            # (B, E+F+H)
    gates = jnp.dot(x.astype(jnp.bfloat16), w_gate_ref[...],
                    preferred_element_type=jnp.float32) + b_gate_ref[...]  # (B, 4H)
    # full-width activations + lane-index blend (torch gate order i, f, g, o)
    lane = jax.lax.broadcasted_iota(jnp.int32, gates.shape, 1)
    g_lanes = (lane >= 2 * H) & (lane < 3 * H)
    acts = jnp.where(g_lanes, jnp.tanh(gates), jax.nn.sigmoid(gates))
    i_g = acts[:, 0 * H:1 * H]
    f_g = acts[:, 1 * H:2 * H]
    g_g = acts[:, 2 * H:3 * H]
    o_g = acts[:, 3 * H:4 * H]
    c_new = f_g * c + i_g * g_g
    h_new = o_g * jnp.tanh(c_new)
    h_sc[...] = h_new
    c_sc[...] = c_new
    hT_ref[...] = h_new          # resident output block; last write wins
    cT_ref[...] = c_new

    # ---------- output projection + log_softmax ----------
    logits = jnp.dot(h_new.astype(jnp.bfloat16), w_out_ref[...],
                     preferred_element_type=jnp.float32) + b_out_ref[...]  # (B, V)
    mx = jnp.max(logits, axis=-1, keepdims=True)
    z = logits - mx
    lse = jnp.log(jnp.sum(jnp.exp(z), axis=-1, keepdims=True))
    logp_ref[...] = z - lse


def decoder_forward(token_ids, hidden, feats, kp):
    """Fused multi-step (teacher-forced) decode.

    token_ids: (T, B) int32; hidden: (h0, c0) each (1, B, H); feats: (B, L, F).
    Returns (logp (T,B,V), (h_T (1,B,H), c_T (1,B,H)), attn_w (T,B,L,1)),
    i.e. the per-step results of calling the torch module T times.
    """
    n_steps = token_ids.shape[0]
    h0_full, c0_full = hidden
    # get_last_hidden: num_layers=1, num_directions=1 -> layer -1
    h0 = h0_full[-1].astype(jnp.float32)
    c0 = c0_full[-1].astype(jnp.float32)
    feats = feats.astype(jnp.float32)

    # --- glue (plain JAX, once per decode): embedding gather + hoisted projection ---
    emb_all = kp["embedding"][token_ids]                                   # (T, B, E)
    uv = jnp.einsum("blf,fa->bla", feats, kp["w_att_u"]) + kp["b_att"][None, :, :]

    def const(shape):
        return pl.BlockSpec(shape, lambda t: (0,) * len(shape))

    grid_spec = pltpu.PrefetchScalarGridSpec(
        num_scalar_prefetch=0,
        grid=(n_steps,),
        in_specs=[
            pl.BlockSpec((None, B, E), lambda t: (t, 0, 0)),   # per-step embedding
            const((B, H)), const((B, H)),                      # h0, c0
            const((B, L, F)), const((B, L, A)),                # feats, hoisted Uv+b
            const((H, A)), const((1, A)),                      # attention params
            const((E + F + H, GATES)), const((1, GATES)),      # merged LSTM weight/bias
            const((H, V)), const((1, V)),                      # output projection
        ],
        out_specs=[
            pl.BlockSpec((None, B, V), lambda t: (t, 0, 0)),   # log-probs per step
            pl.BlockSpec((None, B, L), lambda t: (t, 0, 0)),   # attention weights per step
            const((B, H)), const((B, H)),                      # final h, c
        ],
        scratch_shapes=[pltpu.VMEM((B, H), jnp.float32),
                        pltpu.VMEM((B, H), jnp.float32)],
    )

    out_shapes = (
        jax.ShapeDtypeStruct((n_steps, B, V), jnp.float32),
        jax.ShapeDtypeStruct((n_steps, B, L), jnp.float32),
        jax.ShapeDtypeStruct((B, H), jnp.float32),
        jax.ShapeDtypeStruct((B, H), jnp.float32),
    )

    logp, attn_w, h_t, c_t = pl.pallas_call(
        decoder_step_kernel,
        out_shape=out_shapes,
        grid_spec=grid_spec,
        compiler_params=pltpu.CompilerParams(
            dimension_semantics=("arbitrary",)),   # recurrence across decode steps
    )(
        emb_all, h0, c0, feats, uv,
        kp["w_att_h"].astype(jnp.bfloat16),
        kp["w_att_v"],
        kp["w_gate"].astype(jnp.bfloat16),
        kp["b_gate"],
        kp["w_out"].astype(jnp.bfloat16),
        kp["b_out"],
    )

    new_hidden = (h_t[None, :, :], c_t[None, :, :])   # (num_layers*dirs=1, B, H)
    return logp, new_hidden, attn_w[..., None]        # attn like torch: (..., L, 1)


def init_params(key):
    """Parameters in the PyTorch module's native layouts (gate order i,f,g,o)."""
    ks = jax.random.split(key, 11)
    s = 0.1
    return {
        "embedding": s * jax.random.normal(ks[0], (V, E), jnp.float32),
        # TemporalAttention: score_t = w^T tanh(W h + U v_t + b)
        "att_W": s * jax.random.normal(ks[1], (A, H), jnp.float32),
        "att_U": s * jax.random.normal(ks[2], (A, F), jnp.float32),
        "att_b": s * jax.random.normal(ks[3], (A,), jnp.float32),
        "att_w": s * jax.random.normal(ks[4], (1, A), jnp.float32),
        # LSTM (torch layout): W_ih (4H, E+F) acts on cat([emb, ctx]); W_hh (4H, H)
        "W_ih": s * jax.random.normal(ks[5], (4 * H, E + F), jnp.float32),
        "W_hh": s * jax.random.normal(ks[6], (4 * H, H), jnp.float32),
        "b_ih": s * jax.random.normal(ks[7], (4 * H,), jnp.float32),
        "b_hh": s * jax.random.normal(ks[8], (4 * H,), jnp.float32),
        # output linear: (V, H), (V,)
        "W_out": s * jax.random.normal(ks[9], (V, H), jnp.float32),
        "b_out": s * jax.random.normal(ks[10], (V,), jnp.float32),
    }


def pack_params(p):
    """Repack torch-layout params into the kernel's fused / transposed layout (f32).

    Column (4H) gate ordering of W_ih / W_hh / biases is preserved, so the
    i,f,g,o mapping stays consistent with torch.
    """
    w_gate = jnp.concatenate([p["W_ih"].T, p["W_hh"].T], axis=0)   # (E+F+H, 4H)
    return {
        "embedding": p["embedding"],
        "w_att_h": p["att_W"].T,                     # (H, A)
        "w_att_u": p["att_U"].T,                     # (F, A)
        "b_att": p["att_b"][None, :],                # (1, A)
        "w_att_v": p["att_w"],                       # (1, A)
        "w_gate": w_gate,                            # (E+F+H, 4H)
        "b_gate": (p["b_ih"] + p["b_hh"])[None, :],  # (1, 4H)
        "w_out": p["W_out"].T,                       # (H, V)
        "b_out": p["b_out"][None, :],                # (1, V)
    }


def reference_forward(token_ids, hidden, feats, kp):
    """Pure-JAX f32 reference: the torch module applied step by step."""
    h = hidden[0][-1].astype(jnp.float32)
    c = hidden[1][-1].astype(jnp.float32)
    feats = feats.astype(jnp.float32)
    uv = jnp.einsum("blf,fa->bla", feats, kp["w_att_u"]) + kp["b_att"][None, :, :]
    logps, attws = [], []
    for t in range(token_ids.shape[0]):
        emb = kp["embedding"][token_ids[t]]
        e = jnp.tanh(uv + (h @ kp["w_att_h"])[:, None, :])
        scores = jnp.sum(e * kp["w_att_v"][None, :, :], axis=-1)
        w = jax.nn.softmax(scores, axis=-1)
        ctx = jnp.sum(feats * w[:, :, None], axis=1)
        x = jnp.concatenate([emb, ctx, h], axis=-1)
        gates = x @ kp["w_gate"] + kp["b_gate"]
        i_g = jax.nn.sigmoid(gates[:, 0 * H:1 * H])
        f_g = jax.nn.sigmoid(gates[:, 1 * H:2 * H])
        g_g = jnp.tanh(gates[:, 2 * H:3 * H])
        o_g = jax.nn.sigmoid(gates[:, 3 * H:4 * H])
        c = f_g * c + i_g * g_g
        h = o_g * jnp.tanh(c)
        logits = h @ kp["w_out"] + kp["b_out"]
        logps.append(jax.nn.log_softmax(logits, axis=-1))
        attws.append(w)
    return (jnp.stack(logps), (h[None, :, :], c[None, :, :]),
            jnp.stack(attws)[..., None])


if __name__ == "__main__":
    key = jax.random.PRNGKey(0)
    k_p, k_tok, k_h, k_c, k_f = jax.random.split(key, 5)

    params = pack_params(init_params(k_p))
    token_ids = jax.random.randint(k_tok, (T, B), 0, V, dtype=jnp.int32)   # (steps, B)
    h0 = 0.1 * jax.random.normal(k_h, (1, B, H), jnp.float32)              # (layers*dirs, B, H)
    c0 = 0.1 * jax.random.normal(k_c, (1, B, H), jnp.float32)
    feats = jax.random.normal(k_f, (B, L, F), jnp.float32)

    logp, (h_t, c_t), attn_w = jax.block_until_ready(
        decoder_forward(token_ids, (h0, c0), feats, params))

    # shape / normalization sanity checks
    assert logp.shape == (T, B, V) and attn_w.shape == (T, B, L, 1)
    assert h_t.shape == (1, B, H) and c_t.shape == (1, B, H)
    assert bool(jnp.all(jnp.isfinite(logp)))
    assert bool(jnp.allclose(jnp.sum(jnp.exp(logp), axis=-1), 1.0, atol=1e-3))
    assert bool(jnp.allclose(jnp.sum(attn_w[..., 0], axis=-1), 1.0, atol=5e-3))

    # numerical check against a pure-JAX f32 reference (kernel uses bf16 matmul
    # operands with f32 accumulation -> loose tolerances)
    ref_logp, (ref_h, ref_c), ref_attn = reference_forward(
        token_ids, (h0, c0), feats, params)
    assert bool(jnp.allclose(logp, ref_logp, atol=1e-1))
    assert bool(jnp.allclose(h_t, ref_h, atol=5e-2))
    assert bool(jnp.allclose(c_t, ref_c, atol=5e-2))
    assert bool(jnp.allclose(attn_w, ref_attn, atol=5e-2))

    print("KERNEL_OK")
</pallas_src>

<mosaic_0001>
module attributes {stable_mosaic.version = 11 : i64} {
  func.func @decoder_step_kernel(%arg0: i32, %arg1: memref<1x8x32xf32, #tpu.memory_space<vmem>>, %arg2: memref<8x32xf32, #tpu.memory_space<vmem>>, %arg3: memref<8x32xf32, #tpu.memory_space<vmem>>, %arg4: memref<8x8x16xf32, #tpu.memory_space<vmem>>, %arg5: memref<8x8x16xf32, #tpu.memory_space<vmem>>, %arg6: memref<32x16xbf16, #tpu.memory_space<vmem>>, %arg7: memref<1x16xf32, #tpu.memory_space<vmem>>, %arg8: memref<80x128xbf16, #tpu.memory_space<vmem>>, %arg9: memref<1x128xf32, #tpu.memory_space<vmem>>, %arg10: memref<32x40xbf16, #tpu.memory_space<vmem>>, %arg11: memref<1x40xf32, #tpu.memory_space<vmem>>, %arg12: memref<1x8x40xf32, #tpu.memory_space<vmem>>, %arg13: memref<1x8x8xf32, #tpu.memory_space<vmem>>, %arg14: memref<8x32xf32, #tpu.memory_space<vmem>>, %arg15: memref<8x32xf32, #tpu.memory_space<vmem>>, %arg16: memref<8x32xf32, #tpu.memory_space<vmem>>, %arg17: memref<8x32xf32, #tpu.memory_space<vmem>>) attributes {dimension_semantics = [#tpu.dimension_semantics<arbitrary>], iteration_bounds = array<i64: 6>, scalar_prefetch = 0 : i64, scratch_operands = 2 : i64, tpu.core_type = #tpu.core_type<tc>, window_params = [{transform_indices = @transform_0, window_bounds = array<i64: 1, 8, 32>}, {pipeline_mode = #tpu.pipeline_mode<synchronous>, transform_indices = @transform_1, window_bounds = array<i64: 8, 32>}, {pipeline_mode = #tpu.pipeline_mode<synchronous>, transform_indices = @transform_2, window_bounds = array<i64: 8, 32>}, {pipeline_mode = #tpu.pipeline_mode<synchronous>, transform_indices = @transform_3, window_bounds = array<i64: 8, 8, 16>}, {pipeline_mode = #tpu.pipeline_mode<synchronous>, transform_indices = @transform_4, window_bounds = array<i64: 8, 8, 16>}, {pipeline_mode = #tpu.pipeline_mode<synchronous>, transform_indices = @transform_5, window_bounds = array<i64: 32, 16>}, {pipeline_mode = #tpu.pipeline_mode<synchronous>, transform_indices = @transform_6, window_bounds = array<i64: 1, 16>}, {pipeline_mode = #tpu.pipeline_mode<synchronous>, transform_indices = @transform_7, window_bounds = array<i64: 80, 128>}, {pipeline_mode = #tpu.pipeline_mode<synchronous>, transform_indices = @transform_8, window_bounds = array<i64: 1, 128>}, {pipeline_mode = #tpu.pipeline_mode<synchronous>, transform_indices = @transform_9, window_bounds = array<i64: 32, 40>}, {pipeline_mode = #tpu.pipeline_mode<synchronous>, transform_indices = @transform_10, window_bounds = array<i64: 1, 40>}, {transform_indices = @transform_11, window_bounds = array<i64: 1, 8, 40>}, {transform_indices = @transform_12, window_bounds = array<i64: 1, 8, 8>}, {pipeline_mode = #tpu.pipeline_mode<synchronous>, transform_indices = @transform_13, window_bounds = array<i64: 8, 32>}, {pipeline_mode = #tpu.pipeline_mode<synchronous>, transform_indices = @transform_14, window_bounds = array<i64: 8, 32>}]} {
    %c0_i32 = arith.constant 0 : i32
    %0 = arith.cmpi eq, %arg0, %c0_i32 : i32
    %1 = arith.extui %0 : i1 to i32
    %c0_i32_0 = arith.constant 0 : i32
    %2 = arith.cmpi ne, %1, %c0_i32_0 : i32
    scf.if %2 {
      %c0_48 = arith.constant 0 : index
      %c0_49 = arith.constant 0 : index
      %90 = vector.load %arg2[%c0_48, %c0_49] : memref<8x32xf32, #tpu.memory_space<vmem>>, vector<8x32xf32>
      %c0_50 = arith.constant 0 : index
      %c0_51 = arith.constant 0 : index
      %91 = vector.load %arg16[%c0_50, %c0_51] : memref<8x32xf32, #tpu.memory_space<vmem>>, vector<8x32xf32>
      tpu.vector_store %arg16[%c0_50, %c0_51], %90 {strides = array<i32>} : memref<8x32xf32, #tpu.memory_space<vmem>>, vector<8x32xf32>,
      %c0_52 = arith.constant 0 : index
      %c0_53 = arith.constant 0 : index
      %92 = vector.load %arg3[%c0_52, %c0_53] : memref<8x32xf32, #tpu.memory_space<vmem>>, vector<8x32xf32>
      %c0_54 = arith.constant 0 : index
      %c0_55 = arith.constant 0 : index
      %93 = vector.load %arg17[%c0_54, %c0_55] : memref<8x32xf32, #tpu.memory_space<vmem>>, vector<8x32xf32>
      tpu.vector_store %arg17[%c0_54, %c0_55], %92 {strides = array<i32>} : memref<8x32xf32, #tpu.memory_space<vmem>>, vector<8x32xf32>,
    } else {
    }
    %c0 = arith.constant 0 : index
    %c0_1 = arith.constant 0 : index
    %3 = vector.load %arg16[%c0, %c0_1] : memref<8x32xf32, #tpu.memory_space<vmem>>, vector<8x32xf32>
    %c0_2 = arith.constant 0 : index
    %c0_3 = arith.constant 0 : index
    %4 = vector.load %arg17[%c0_2, %c0_3] : memref<8x32xf32, #tpu.memory_space<vmem>>, vector<8x32xf32>
    %c0_4 = arith.constant 0 : index
    %c0_5 = arith.constant 0 : index
    %c0_6 = arith.constant 0 : index
    %5 = vector.load %arg1[%c0_4, %c0_5, %c0_6] : memref<1x8x32xf32, #tpu.memory_space<vmem>>, vector<1x8x32xf32>
    %6 = vector.shape_cast %5 : vector<1x8x32xf32> to vector<8x32xf32>
    %c0_7 = arith.constant 0 : index
    %c0_8 = arith.constant 0 : index
    %c0_9 = arith.constant 0 : index
    %7 = vector.load %arg4[%c0_7, %c0_8, %c0_9] : memref<8x8x16xf32, #tpu.memory_space<vmem>>, vector<8x8x16xf32>
    %8 = arith.truncf %3 : vector<8x32xf32> to vector<8x32xbf16>
    %c0_10 = arith.constant 0 : index
    %c0_11 = arith.constant 0 : index
    %9 = vector.load %arg6[%c0_10, %c0_11] : memref<32x16xbf16, #tpu.memory_space<vmem>>, vector<32x16xbf16>
    %cst = arith.constant dense<0.000000e+00> : vector<8x16xf32>
    %10 = tpu.matmul %8, %9, %cst {dimension_numbers = #tpu.dot_dimension_numbers<[1], [0], [0], [1], [0, 0, 1, 1], [], []>} : vector<8x32xbf16>, vector<32x16xbf16>, vector<8x16xf32> -> vector<8x16xf32>
    %c0_12 = arith.constant 0 : index
    %c0_13 = arith.constant 0 : index
    %c0_14 = arith.constant 0 : index
    %11 = vector.load %arg5[%c0_12, %c0_13, %c0_14] : memref<8x8x16xf32, #tpu.memory_space<vmem>>, vector<8x8x16xf32>
    %12 = vector.shape_cast %10 : vector<8x16xf32> to vector<8x1x16xf32>
    %13 = vector.broadcast %12 : vector<8x1x16xf32> to vector<8x8x16xf32>
    %14 = arith.addf %11, %13 : vector<8x8x16xf32>
    %15 = math.tanh %14 : vector<8x8x16xf32>
    %c0_15 = arith.constant 0 : index
    %c0_16 = arith.constant 0 : index
    %16 = vector.load %arg7[%c0_15, %c0_16] : memref<1x16xf32, #tpu.memory_space<vmem>>, vector<1x16xf32>
    %17 = vector.shape_cast %16 : vector<1x16xf32> to vector<1x1x16xf32>
    %18 = vector.broadcast %17 : vector<1x1x16xf32> to vector<8x8x16xf32>
    %19 = arith.mulf %15, %18 : vector<8x8x16xf32>
    %cst_17 = arith.constant dense<0.000000e+00> : vector<8x8xf32>
    %20 = vector.multi_reduction <add>, %19, %cst_17 [2] : vector<8x8x16xf32> to vector<8x8xf32>
    %cst_18 = arith.constant dense<0xFF800000> : vector<8xf32>
    %21 = vector.multi_reduction <maximumf>, %20, %cst_18 [1] : vector<8x8xf32> to vector<8xf32>
    %22 = vector.shape_cast %21 : vector<8xf32> to vector<8x1xf32>
    %23 = vector.broadcast %22 : vector<8x1xf32> to vector<8x8xf32>
    %24 = arith.subf %20, %23 : vector<8x8xf32>
    %25 = math.exp %24 : vector<8x8xf32>
    %cst_19 = arith.constant dense<0.000000e+00> : vector<8xf32>
    %26 = vector.multi_reduction <add>, %25, %cst_19 [1] : vector<8x8xf32> to vector<8xf32>
    %27 = vector.shape_cast %26 : vector<8xf32> to vector<8x1xf32>
    %28 = tpu.reciprocal %27 {approx = true} : vector<8x1xf32> -> vector<8x1xf32>
    %29 = vector.broadcast %28 : vector<8x1xf32> to vector<8x8xf32>
    %30 = arith.mulf %25, %29 : vector<8x8xf32>
    %c0_20 = arith.constant 0 : index
    %c0_21 = arith.constant 0 : index
    %c0_22 = arith.constant 0 : index
    %31 = vector.load %arg13[%c0_20, %c0_21, %c0_22] : memref<1x8x8xf32, #tpu.memory_space<vmem>>, vector<1x8x8xf32>
    %32 = vector.shape_cast %31 : vector<1x8x8xf32> to vector<8x8xf32>
    %33 = vector.shape_cast %30 : vector<8x8xf32> to vector<1x8x8xf32>
    tpu.vector_store %arg13[%c0_20, %c0_21, %c0_22], %33 {strides = array<i32>} : memref<1x8x8xf32, #tpu.memory_space<vmem>>, vector<1x8x8xf32>,
    %34 = vector.shape_cast %30 : vector<8x8xf32> to vector<8x8x1xf32>
    %35 = vector.broadcast %34 : vector<8x8x1xf32> to vector<8x8x16xf32>
    %36 = arith.mulf %7, %35 : vector<8x8x16xf32>
    %cst_23 = arith.constant dense<0.000000e+00> : vector<8x16xf32>
    %37 = vector.multi_reduction <add>, %36, %cst_23 [1] : vector<8x8x16xf32> to vector<8x16xf32>
    %38 = tpu.concatenate %6, %37, %3 in 1 : vector<8x32xf32>, vector<8x16xf32>, vector<8x32xf32> -> vector<8x80xf32>
    %39 = arith.truncf %38 : vector<8x80xf32> to vector<8x80xbf16>
    %c0_24 = arith.constant 0 : index
    %c0_25 = arith.constant 0 : index
    %40 = vector.load %arg8[%c0_24, %c0_25] : memref<80x128xbf16, #tpu.memory_space<vmem>>, vector<80x128xbf16>
    %cst_26 = arith.constant dense<0.000000e+00> : vector<8x128xf32>
    %41 = tpu.matmul %39, %40, %cst_26 {dimension_numbers = #tpu.dot_dimension_numbers<[1], [0], [0], [1], [0, 0, 1, 1], [], []>} : vector<8x80xbf16>, vector<80x128xbf16>, vector<8x128xf32> -> vector<8x128xf32>
    %c0_27 = arith.constant 0 : index
    %c0_28 = arith.constant 0 : index
    %42 = vector.load %arg9[%c0_27, %c0_28] : memref<1x128xf32, #tpu.memory_space<vmem>>, vector<1x128xf32>
    %43 = vector.broadcast %42 : vector<1x128xf32> to vector<8x128xf32>
    %44 = arith.addf %41, %43 : vector<8x128xf32>
    %45 = tpu.iota {dimensions = array<i32: 1>} : vector<8x128xi32>
    %c64_i32 = arith.constant 64 : i32
    %46 = vector.broadcast %c64_i32 : i32 to vector<8x128xi32>
    %47 = arith.cmpi sge, %45, %46 : vector<8x128xi32>
    %c96_i32 = arith.constant 96 : i32
    %48 = vector.broadcast %c96_i32 : i32 to vector<8x128xi32>
    %49 = arith.cmpi slt, %45, %48 : vector<8x128xi32>
    %50 = arith.andi %47, %49 : vector<8x128xi1>
    %51 = math.tanh %44 : vector<8x128xf32>
    %52 = arith.negf %44 : vector<8x128xf32>
    %53 = math.exp %52 : vector<8x128xf32>
    %cst_29 = arith.constant 1.000000e+00 : f32
    %54 = vector.broadcast %cst_29 : f32 to vector<8x128xf32>
    %55 = arith.addf %54, %53 : vector<8x128xf32>
    %56 = arith.divf %54, %55 : vector<8x128xf32>
    %57 = arith.select %50, %51, %56 : vector<8x128xi1>, vector<8x128xf32>
    %58 = vector.extract_strided_slice %57 {offsets = [0, 0], sizes = [8, 32], strides = [1, 1]} : vector<8x128xf32> to vector<8x32xf32>
    %59 = vector.extract_strided_slice %57 {offsets = [0, 32], sizes = [8, 32], strides = [1, 1]} : vector<8x128xf32> to vector<8x32xf32>
    %60 = vector.extract_strided_slice %57 {offsets = [0, 64], sizes = [8, 32], strides = [1, 1]} : vector<8x128xf32> to vector<8x32xf32>
    %61 = vector.extract_strided_slice %57 {offsets = [0, 96], sizes = [8, 32], strides = [1, 1]} : vector<8x128xf32> to vector<8x32xf32>
    %62 = arith.mulf %59, %4 : vector<8x32xf32>
    %63 = arith.mulf %58, %60 : vector<8x32xf32>
    %64 = arith.addf %62, %63 : vector<8x32xf32>
    %65 = math.tanh %64 : vector<8x32xf32>
    %66 = arith.mulf %61, %65 : vector<8x32xf32>
    %c0_30 = arith.constant 0 : index
    %c0_31 = arith.constant 0 : index
    %67 = vector.load %arg16[%c0_30, %c0_31] : memref<8x32xf32, #tpu.memory_space<vmem>>, vector<8x32xf32>
    tpu.vector_store %arg16[%c0_30, %c0_31], %66 {strides = array<i32>} : memref<8x32xf32, #tpu.memory_space<vmem>>, vector<8x32xf32>,
    %c0_32 = arith.constant 0 : index
    %c0_33 = arith.constant 0 : index
    %68 = vector.load %arg17[%c0_32, %c0_33] : memref<8x32xf32, #tpu.memory_space<vmem>>, vector<8x32xf32>
    tpu.vector_store %arg17[%c0_32, %c0_33], %64 {strides = array<i32>} : memref<8x32xf32, #tpu.memory_space<vmem>>, vector<8x32xf32>,
    %c0_34 = arith.constant 0 : index
    %c0_35 = arith.constant 0 : index
    %69 = vector.load %arg14[%c0_34, %c0_35] : memref<8x32xf32, #tpu.memory_space<vmem>>, vector<8x32xf32>
    tpu.vector_store %arg14[%c0_34, %c0_35], %66 {strides = array<i32>} : memref<8x32xf32, #tpu.memory_space<vmem>>, vector<8x32xf32>,
    %c0_36 = arith.constant 0 : index
    %c0_37 = arith.constant 0 : index
    %70 = vector.load %arg15[%c0_36, %c0_37] : memref<8x32xf32, #tpu.memory_space<vmem>>, vector<8x32xf32>
    tpu.vector_store %arg15[%c0_36, %c0_37], %64 {strides = array<i32>} : memref<8x32xf32, #tpu.memory_space<vmem>>, vector<8x32xf32>,
    %71 = arith.truncf %66 : vector<8x32xf32> to vector<8x32xbf16>
    %c0_38 = arith.constant 0 : index
    %c0_39 = arith.constant 0 : index
    %72 = vector.load %arg10[%c0_38, %c0_39] : memref<32x40xbf16, #tpu.memory_space<vmem>>, vector<32x40xbf16>
    %cst_40 = arith.constant dense<0.000000e+00> : vector<8x40xf32>
    %73 = tpu.matmul %71, %72, %cst_40 {dimension_numbers = #tpu.dot_dimension_numbers<[1], [0], [0], [1], [0, 0, 1, 1], [], []>} : vector<8x32xbf16>, vector<32x40xbf16>, vector<8x40xf32> -> vector<8x40xf32>
    %c0_41 = arith.constant 0 : index
    %c0_42 = arith.constant 0 : index
    %74 = vector.load %arg11[%c0_41, %c0_42] : memref<1x40xf32, #tpu.memory_space<vmem>>, vector<1x40xf32>
    %75 = vector.broadcast %74 : vector<1x40xf32> to vector<8x40xf32>
    %76 = arith.addf %73, %75 : vector<8x40xf32>
    %cst_43 = arith.constant dense<0xFF800000> : vector<8xf32>
    %77 = vector.multi_reduction <maximumf>, %76, %cst_43 [1] : vector<8x40xf32> to vector<8xf32>
    %78 = vector.shape_cast %77 : vector<8xf32> to vector<8x1xf32>
    %79 = vector.broadcast %78 : vector<8x1xf32> to vector<8x40xf32>
    %80 = arith.subf %76, %79 : vector<8x40xf32>
    %81 = math.exp %80 : vector<8x40xf32>
    %cst_44 = arith.constant dense<0.000000e+00> : vector<8xf32>
    %82 = vector.multi_reduction <add>, %81, %cst_44 [1] : vector<8x40xf32> to vector<8xf32>
    %83 = vector.shape_cast %82 : vector<8xf32> to vector<8x1xf32>
    %84 = math.log %83 : vector<8x1xf32>
    %85 = vector.broadcast %84 : vector<8x1xf32> to vector<8x40xf32>
    %86 = arith.subf %80, %85 : vector<8x40xf32>
    %c0_45 = arith.constant 0 : index
    %c0_46 = arith.constant 0 : index
    %c0_47 = arith.constant 0 : index
    %87 = vector.load %arg12[%c0_45, %c0_46, %c0_47] : memref<1x8x40xf32, #tpu.memory_space<vmem>>, vector<1x8x40xf32>
    %88 = vector.shape_cast %87 : vector<1x8x40xf32> to vector<8x40xf32>
    %89 = vector.shape_cast %86 : vector<8x40xf32> to vector<1x8x40xf32>
    tpu.vector_store %arg12[%c0_45, %c0_46, %c0_47], %89 {strides = array<i32>} : memref<1x8x40xf32, #tpu.memory_space<vmem>>, vector<1x8x40xf32>,
    return
  }
  func.func @transform_0(%arg0: i32) -> (i32, i32, i32) {
    %c0_i32 = arith.constant 0 : i32
    %c0_i32_0 = arith.constant 0 : i32
    %c0_i32_1 = arith.constant 0 : i32
    return %arg0, %c0_i32, %c0_i32_0 : i32, i32, i32
  }
  func.func @transform_1(%arg0: i32) -> (i32, i32) {
    %c0_i32 = arith.constant 0 : i32
    %c0_i32_0 = arith.constant 0 : i32
    %c0_i32_1 = arith.constant 0 : i32
    return %c0_i32, %c0_i32_0 : i32, i32
  }
  func.func @transform_2(%arg0: i32) -> (i32, i32) {
    %c0_i32 = arith.constant 0 : i32
    %c0_i32_0 = arith.constant 0 : i32
    %c0_i32_1 = arith.constant 0 : i32
    return %c0_i32, %c0_i32_0 : i32, i32
  }
  func.func @transform_3(%arg0: i32) -> (i32, i32, i32) {
    %c0_i32 = arith.constant 0 : i32
    %c0_i32_0 = arith.constant 0 : i32
    %c0_i32_1 = arith.constant 0 : i32
    %c0_i32_2 = arith.constant 0 : i32
    return %c0_i32, %c0_i32_0, %c0_i32_1 : i32, i32, i32
  }
  func.func @transform_4(%arg0: i32) -> (i32, i32, i32) {
    %c0_i32 = arith.constant 0 : i32
    %c0_i32_0 = arith.constant 0 : i32
    %c0_i32_1 = arith.constant 0 : i32
    %c0_i32_2 = arith.constant 0 : i32
    return %c0_i32, %c0_i32_0, %c0_i32_1 : i32, i32, i32
  }
  func.func @transform_5(%arg0: i32) -> (i32, i32) {
    %c0_i32 = arith.constant 0 : i32
    %c0_i32_0 = arith.constant 0 : i32
    %c0_i32_1 = arith.constant 0 : i32
    return %c0_i32, %c0_i32_0 : i32, i32
  }
  func.func @transform_6(%arg0: i32) -> (i32, i32) {
    %c0_i32 = arith.constant 0 : i32
    %c0_i32_0 = arith.constant 0 : i32
    %c0_i32_1 = arith.constant 0 : i32
    return %c0_i32, %c0_i32_0 : i32, i32
  }
  func.func @transform_7(%arg0: i32) -> (i32, i32) {
    %c0_i32 = arith.constant 0 : i32
    %c0_i32_0 = arith.constant 0 : i32
    %c0_i32_1 = arith.constant 0 : i32
    return %c0_i32, %c0_i32_0 : i32, i32
  }
  func.func @transform_8(%arg0: i32) -> (i32, i32) {
    %c0_i32 = arith.constant 0 : i32
    %c0_i32_0 = arith.constant 0 : i32
    %c0_i32_1 = arith.constant 0 : i32
    return %c0_i32, %c0_i32_0 : i32, i32
  }
  func.func @transform_9(%arg0: i32) -> (i32, i32) {
    %c0_i32 = arith.constant 0 : i32
    %c0_i32_0 = arith.constant 0 : i32
    %c0_i32_1 = arith.constant 0 : i32
    return %c0_i32, %c0_i32_0 : i32, i32
  }
  func.func @transform_10(%arg0: i32) -> (i32, i32) {
    %c0_i32 = arith.constant 0 : i32
    %c0_i32_0 = arith.constant 0 : i32
    %c0_i32_1 = arith.constant 0 : i32
    return %c0_i32, %c0_i32_0 : i32, i32
  }
  func.func @transform_11(%arg0: i32) -> (i32, i32, i32) {
    %c0_i32 = arith.constant 0 : i32
    %c0_i32_0 = arith.constant 0 : i32
    %c0_i32_1 = arith.constant 0 : i32
    return %arg0, %c0_i32, %c0_i32_0 : i32, i32, i32
  }
  func.func @transform_12(%arg0: i32) -> (i32, i32, i32) {
    %c0_i32 = arith.constant 0 : i32
    %c0_i32_0 = arith.constant 0 : i32
    %c0_i32_1 = arith.constant 0 : i32
    return %arg0, %c0_i32, %c0_i32_0 : i32, i32, i32
  }
  func.func @transform_13(%arg0: i32) -> (i32, i32) {
    %c0_i32 = arith.constant 0 : i32
    %c0_i32_0 = arith.constant 0 : i32
    %c0_i32_1 = arith.constant 0 : i32
    return %c0_i32, %c0_i32_0 : i32, i32
  }
  func.func @transform_14(%arg0: i32) -> (i32, i32) {
    %c0_i32 = arith.constant 0 : i32
    %c0_i32_0 = arith.constant 0 : i32
    %c0_i32_1 = arith.constant 0 : i32
    return %c0_i32, %c0_i32_0 : i32, i32
  }
}

</mosaic_0001>

<llo_original>
// kernel: tpu_custom_call.1
$region0: #{tpu_custom_call.1}
  #allocation0 [shape = 'u32[]', space=smem, size = 0x4, offset = 0x4, fixed_abs, tag = 'smem constant byte address 0x4 - core index']
  #allocation1 [shape = 'u32[72,128]{1,0:T(1,128)}', space=vmem, size = 0x9000, scoped, tag = 'internal scratch']
  #allocation2 [shape = 'f32[8,32]{1,0:T(8,128)}', space=vmem, size = 0x1000, scoped, tag = 'scratch operand']
  #allocation3 [shape = 'f32[8,32]{1,0:T(8,128)}', space=vmem, size = 0x1000, scoped, tag = 'scratch operand']
  %s0 = inlined_call_operand.hbm [shape: f32[6,8,32], index: 0, kind: input, shape index: {}]
  %s1 = inlined_call_operand.vmem [shape: f32[8,32], index: 1, kind: input, shape index: {}]
  %s2 = inlined_call_operand.hbm [shape: f32[8,32], index: 2, kind: input, shape index: {}]
  %s3 = inlined_call_operand.hbm [shape: f32[8,8,16], index: 3, kind: input, shape index: {}]
  %s4 = inlined_call_operand.hbm [shape: f32[8,8,16], index: 4, kind: input, shape index: {}]
  %s5 = inlined_call_operand.vmem [shape: bf16[32,16], index: 5, kind: input, shape index: {}]
  %s6 = inlined_call_operand.vmem [shape: f32[1,16], index: 6, kind: input, shape index: {}]
  %s7 = inlined_call_operand.hbm [shape: bf16[80,128], index: 7, kind: input, shape index: {}]
  %s8 = inlined_call_operand.vmem [shape: f32[1,128], index: 8, kind: input, shape index: {}]
  %s9 = inlined_call_operand.vmem [shape: bf16[32,40], index: 9, kind: input, shape index: {}]
  %s10 = inlined_call_operand.vmem [shape: f32[1,40], index: 10, kind: input, shape index: {}]
  %s11 = inlined_call_operand.hbm [shape: f32[6,8,40], index: 11, kind: output, shape index: {0}]
  %s12 = inlined_call_operand.hbm [shape: f32[6,8,8], index: 12, kind: output, shape index: {1}]
  %s13 = inlined_call_operand.hbm [shape: f32[8,32], index: 13, kind: output, shape index: {2}]
  %s14 = inlined_call_operand.hbm [shape: f32[8,32], index: 14, kind: output, shape index: {3}]
  %15 = xla_tuple %s11, %s12, %s13, %s14
  %s16 = sld [smem:[#allocation0]]
  $region125: #{tpu_custom_call.1} parent=0
    _
  %s18 = ssub.s32 1, %s16
  %s19 = scalar_select 0, %s18, %s16
  $region1: #{tpu_custom_call.1} parent=0
    #allocation4 [shape = 'u8[8192]{0}', space=vmem, size = 0x2000, scoped, tag = 'input window, operand 0']
    #allocation5 [shape = 's32[2]{0}', space=sflag, size = 0x8, scoped, tag = 'scoped memory for tpu_custom_call.1']
    #allocation6 [shape = 's32[2]{0}', space=sflag, size = 0x8, scoped, tag = 'scoped memory for tpu_custom_call.1']
    #allocation7 [shape = 'u8[4096]{0}', space=vmem, size = 0x1000, scoped, tag = 'input window, operand 2, single buffered']
    #allocation8 [shape = 's32[1]{0}', space=sflag, size = 0x4, scoped, tag = 'scoped memory for tpu_custom_call.1']
    #allocation9 [shape = 'u8[32768]{0}', space=vmem, size = 0x8000, scoped, tag = 'input window, operand 3, single buffered']
    #allocation10 [shape = 'u8[32768]{0}', space=vmem, size = 0x8000, scoped, tag = 'input window, operand 4, single buffered']
    #allocation11 [shape = 's32[1]{0}', space=sflag, size = 0x4, scoped, tag = 'scoped memory for tpu_custom_call.1']
    #allocation12 [shape = 'u8[20480]{0}', space=vmem, size = 0x5000, scoped, tag = 'input window, operand 7, single buffered']
    #allocation13 [shape = 'u8[8192]{0}', space=vmem, size = 0x2000, scoped, tag = 'output window, operand 0']
    #allocation14 [shape = 'u8[8192]{0}', space=vmem, size = 0x2000, scoped, tag = 'output window, operand 1']
    #allocation15 [shape = 's32[2]{0}', space=sflag, size = 0x8, scoped, tag = 'scoped memory for tpu_custom_call.1']
    #allocation16 [shape = 'u8[4096]{0}', space=vmem, size = 0x1000, scoped, tag = 'output window, operand 2, single buffered']
    #allocation17 [shape = 'u8[4096]{0}', space=vmem, size = 0x1000, scoped, tag = 'output window, operand 3, single buffered']
    #allocation18 [shape = 's32[1]{0}', space=sflag, size = 0x4, scoped, tag = 'scoped memory for tpu_custom_call.1']
    %20 = vsyncpa [#allocation5], 0
    %s21 = scalar_lea.sflag [#allocation5], 1
    %22 = vsyncpa %s21, 0
    %23 = vsyncpa [#allocation8], 0
    %24 = vsyncpa [#allocation11], 0
    %25 = vsyncpa [#allocation6], 0
    %s26 = scalar_lea.sflag [#allocation6], 1
    %27 = vsyncpa %s26, 0
    %28 = vsyncpa [#allocation15], 0
    %s29 = scalar_lea.sflag [#allocation15], 1
    %30 = vsyncpa %s29, 0
    %31 = vsyncpa [#allocation18], 0
    loop: start=0, step=1, limit=8
    $region2: #{tpu_custom_call.1} parent=1 // loop_pre_header
      _
    $region3: #{tpu_custom_call.1} parent=1 // loop_header
      %s33 = sphi 0, %s37
      %p34 = scmp.ge.s32.totalorder %s33, 8
      %s43 = sphi 0, %s45
      %s46 = sphi 0, %s43
      %s47 = sphi 0, %s46
      %s63 = sphi 0, %s47
      %s67 = sphi 0, %s67
      %s69 = sphi 0, %s67
      %s70 = sphi 0, %s69
      %s84 = sphi 0, %s70
      %s88 = sphi 0, %s88
      %s90 = sphi 0, %s88
      %s91 = sphi 0, %s90
      %s105 = sphi 0, %s91
      %s109 = sphi 0, %s109
      %s111 = sphi 0, %s109
      %s112 = sphi 0, %s111
      %s126 = sphi 0, %s112
      %s130 = sphi 0, %s130
      %s132 = sphi 0, %s130
      %s133 = sphi 0, %s132
      %s147 = sphi 0, %s133
      %s151 = sphi 0, %s151
      %s153 = sphi 0, %s151
      %s154 = sphi 0, %s153
      %s168 = sphi 0, %s154
      %s172 = sphi 0, %s172
      %s174 = sphi 0, %s172
      %s175 = sphi 0, %s174
      %s189 = sphi 0, %s175
      %s193 = sphi 0, %s193
      %s195 = sphi 0, %s193
      %s196 = sphi 0, %s195
      %s210 = sphi 0, %s196
      %s214 = sphi 0, %s214
      %s216 = sphi 0, %s214
      %s217 = sphi 0, %s216
      %s231 = sphi 0, %s217
      %s235 = sphi 0, %s235
      %s237 = sphi 0, %s235
      %s238 = sphi 0, %s237
      %s252 = sphi 0, %s238
      %s256 = sphi 0, %s256
      %s258 = sphi 0, %s256
      %s259 = sphi 0, %s258
      %s273 = sphi 0, %s259
      %s279 = sphi 0, %s281
      %s282 = sphi 0, %s279
      %s283 = sphi 0, %s282
      %s299 = sphi 0, %s283
      %s305 = sphi 0, %s307
      %s308 = sphi 0, %s305
      %s309 = sphi 0, %s308
      %s325 = sphi 0, %s309
      %s329 = sphi 0, %s329
      %s331 = sphi 0, %s329
      %s332 = sphi 0, %s331
      %s346 = sphi 0, %s332
      %s350 = sphi 0, %s350
      %s352 = sphi 0, %s350
      %s353 = sphi 0, %s352
      %s367 = sphi 0, %s353
    $region4: #{tpu_custom_call.1} parent=1 // loop_header_branch
      %36 = sbr.rel (%p34) target = $region8
    $region5: #{tpu_custom_call.1} parent=1 // loop_body
      %s38 = ssub.s32 %s33, 1
      %s39 = ssub.s32 %s33, 2
      %s40 = sadd.s32 %s33, 1
      %s41 = ssub.s32 %s33, %s40
      %p42 = scmp.eq.s32.totalorder %s41, 0
      %s44 = sadd.s32 %s43, 1
      %s45 = scalar_select %p42, %s43, %s44
      %p48 = pneg %p42
      %p49 = scmp.eq.s32.totalorder %s33, 5
      %p50 = por %p48, %p49
      %p51 = scmp.ne.s32.totalorder %s43, %s46
      %p52 = scmp.eq.s32.totalorder %s33, 0
      %p53 = por %p51, %p52
      %p54 = scmp.ne.s32.totalorder %s43, %s46
      %p55 = scmp.eq.s32.totalorder %s38, 5
      %p56 = por %p54, %p55
      %p57 = scmp.ne.s32.totalorder %s46, %s47
      %p58 = scmp.eq.s32.totalorder %s38, 0
      %p59 = por %p57, %p58
      %p60 = scmp.ne.s32.totalorder %s46, %s47
      %p61 = scmp.eq.s32.totalorder %s39, 5
      %p62 = por %p60, %p61
      %p64 = scmp.ne.s32.totalorder %s47, %s63
      %p65 = scmp.eq.s32.totalorder %s39, 0
      %p66 = por %p64, %p65
      %s68 = sadd.s32 %s67, 1
      %p71 = scmp.eq.s32.totalorder %s33, 5
      %p72 = scmp.ne.s32.totalorder %s67, %s69
      %p73 = scmp.eq.s32.totalorder %s33, 0
      %p74 = por %p72, %p73
      %p75 = scmp.ne.s32.totalorder %s67, %s69
      %p76 = scmp.eq.s32.totalorder %s38, 5
      %p77 = por %p75, %p76
      %p78 = scmp.ne.s32.totalorder %s69, %s70
      %p79 = scmp.eq.s32.totalorder %s38, 0
      %p80 = por %p78, %p79
      %p81 = scmp.ne.s32.totalorder %s69, %s70
      %p82 = scmp.eq.s32.totalorder %s39, 5
      %p83 = por %p81, %p82
      %p85 = scmp.ne.s32.totalorder %s70, %s84
      %p86 = scmp.eq.s32.totalorder %s39, 0
      %p87 = por %p85, %p86
      %s89 = sadd.s32 %s88, 1
      %p92 = scmp.eq.s32.totalorder %s33, 5
      %p93 = scmp.ne.s32.totalorder %s88, %s90
      %p94 = scmp.eq.s32.totalorder %s33, 0
      %p95 = por %p93, %p94
      %p96 = scmp.ne.s32.totalorder %s88, %s90
      %p97 = scmp.eq.s32.totalorder %s38, 5
      %p98 = por %p96, %p97
      %p99 = scmp.ne.s32.totalorder %s90, %s91
      %p100 = scmp.eq.s32.totalorder %s38, 0
      %p101 = por %p99, %p100
      %p102 = scmp.ne.s32.totalorder %s90, %s91
      %p103 = scmp.eq.s32.totalorder %s39, 5
      %p104 = por %p102, %p103
      %p106 = scmp.ne.s32.totalorder %s91, %s105
      %p107 = scmp.eq.s32.totalorder %s39, 0
      %p108 = por %p106, %p107
      %s110 = sadd.s32 %s109, 1
      %p113 = scmp.eq.s32.totalorder %s33, 5
      %p114 = scmp.ne.s32.totalorder %s109, %s111
      %p115 = scmp.eq.s32.totalorder %s33, 0
      %p116 = por %p114, %p115
      %p117 = scmp.ne.s32.totalorder %s109, %s111
      %p118 = scmp.eq.s32.totalorder %s38, 5
      %p119 = por %p117, %p118
      %p120 = scmp.ne.s32.totalorder %s111, %s112
      %p121 = scmp.eq.s32.totalorder %s38, 0
      %p122 = por %p120, %p121
      %p123 = scmp.ne.s32.totalorder %s111, %s112
      %p124 = scmp.eq.s32.totalorder %s39, 5
      %p125 = por %p123, %p124
      %p127 = scmp.ne.s32.totalorder %s112, %s126
      %p128 = scmp.eq.s32.totalorder %s39, 0
      %p129 = por %p127, %p128
      %s131 = sadd.s32 %s130, 1
      %p134 = scmp.eq.s32.totalorder %s33, 5
      %p135 = scmp.ne.s32.totalorder %s130, %s132
      %p136 = scmp.eq.s32.totalorder %s33, 0
      %p137 = por %p135, %p136
      %p138 = scmp.ne.s32.totalorder %s130, %s132
      %p139 = scmp.eq.s32.totalorder %s38, 5
      %p140 = por %p138, %p139
      %p141 = scmp.ne.s32.totalorder %s132, %s133
      %p142 = scmp.eq.s32.totalorder %s38, 0
      %p143 = por %p141, %p142
      %p144 = scmp.ne.s32.totalorder %s132, %s133
      %p145 = scmp.eq.s32.totalorder %s39, 5
      %p146 = por %p144, %p145
      %p148 = scmp.ne.s32.totalorder %s133, %s147
      %p149 = scmp.eq.s32.totalorder %s39, 0
      %p150 = por %p148, %p149
      %s152 = sadd.s32 %s151, 1
      %p155 = scmp.eq.s32.totalorder %s33, 5
      %p156 = scmp.ne.s32.totalorder %s151, %s153
      %p157 = scmp.eq.s32.totalorder %s33, 0
      %p158 = por %p156, %p157
      %p159 = scmp.ne.s32.totalorder %s151, %s153
      %p160 = scmp.eq.s32.totalorder %s38, 5
      %p161 = por %p159, %p160
      %p162 = scmp.ne.s32.totalorder %s153, %s154
      %p163 = scmp.eq.s32.totalorder %s38, 0
      %p164 = por %p162, %p163
      %p165 = scmp.ne.s32.totalorder %s153, %s154
      %p166 = scmp.eq.s32.totalorder %s39, 5
      %p167 = por %p165, %p166
      %p169 = scmp.ne.s32.totalorder %s154, %s168
      %p170 = scmp.eq.s32.totalorder %s39, 0
      %p171 = por %p169, %p170
      %s173 = sadd.s32 %s172, 1
      %p176 = scmp.eq.s32.totalorder %s33, 5
      %p177 = scmp.ne.s32.totalorder %s172, %s174
      %p178 = scmp.eq.s32.totalorder %s33, 0
      %p179 = por %p177, %p178
      %p180 = scmp.ne.s32.totalorder %s172, %s174
      %p181 = scmp.eq.s32.totalorder %s38, 5
      %p182 = por %p180, %p181
      %p183 = scmp.ne.s32.totalorder %s174, %s175
      %p184 = scmp.eq.s32.totalorder %s38, 0
      %p185 = por %p183, %p184
      %p186 = scmp.ne.s32.totalorder %s174, %s175
      %p187 = scmp.eq.s32.totalorder %s39, 5
      %p188 = por %p186, %p187
      %p190 = scmp.ne.s32.totalorder %s175, %s189
      %p191 = scmp.eq.s32.totalorder %s39, 0
      %p192 = por %p190, %p191
      %s194 = sadd.s32 %s193, 1
      %p197 = scmp.eq.s32.totalorder %s33, 5
      %p198 = scmp.ne.s32.totalorder %s193, %s195
      %p199 = scmp.eq.s32.totalorder %s33, 0
      %p200 = por %p198, %p199
      %p201 = scmp.ne.s32.totalorder %s193, %s195
      %p202 = scmp.eq.s32.totalorder %s38, 5
      %p203 = por %p201, %p202
      %p204 = scmp.ne.s32.totalorder %s195, %s196
      %p205 = scmp.eq.s32.totalorder %s38, 0
      %p206 = por %p204, %p205
      %p207 = scmp.ne.s32.totalorder %s195, %s196
      %p208 = scmp.eq.s32.totalorder %s39, 5
      %p209 = por %p207, %p208
      %p211 = scmp.ne.s32.totalorder %s196, %s210
      %p212 = scmp.eq.s32.totalorder %s39, 0
      %p213 = por %p211, %p212
      %s215 = sadd.s32 %s214, 1
      %p218 = scmp.eq.s32.totalorder %s33, 5
      %p219 = scmp.ne.s32.totalorder %s214, %s216
      %p220 = scmp.eq.s32.totalorder %s33, 0
      %p221 = por %p219, %p220
      %p222 = scmp.ne.s32.totalorder %s214, %s216
      %p223 = scmp.eq.s32.totalorder %s38, 5
      %p224 = por %p222, %p223
      %p225 = scmp.ne.s32.totalorder %s216, %s217
      %p226 = scmp.eq.s32.totalorder %s38, 0
      %p227 = por %p225, %p226
      %p228 = scmp.ne.s32.totalorder %s216, %s217
      %p229 = scmp.eq.s32.totalorder %s39, 5
      %p230 = por %p228, %p229
      %p232 = scmp.ne.s32.totalorder %s217, %s231
      %p233 = scmp.eq.s32.totalorder %s39, 0
      %p234 = por %p232, %p233
      %s236 = sadd.s32 %s235, 1
      %p239 = scmp.eq.s32.totalorder %s33, 5
      %p240 = scmp.ne.s32.totalorder %s235, %s237
      %p241 = scmp.eq.s32.totalorder %s33, 0
      %p242 = por %p240, %p241
      %p243 = scmp.ne.s32.totalorder %s235, %s237
      %p244 = scmp.eq.s32.totalorder %s38, 5
      %p245 = por %p243, %p244
      %p246 = scmp.ne.s32.totalorder %s237, %s238
      %p247 = scmp.eq.s32.totalorder %s38, 0
      %p248 = por %p246, %p247
      %p249 = scmp.ne.s32.totalorder %s237, %s238
      %p250 = scmp.eq.s32.totalorder %s39, 5
      %p251 = por %p249, %p250
      %p253 = scmp.ne.s32.totalorder %s238, %s252
      %p254 = scmp.eq.s32.totalorder %s39, 0
      %p255 = por %p253, %p254
      %s257 = sadd.s32 %s256, 1
      %p260 = scmp.eq.s32.totalorder %s33, 5
      %p261 = scmp.ne.s32.totalorder %s256, %s258
      %p262 = scmp.eq.s32.totalorder %s33, 0
      %p263 = por %p261, %p262
      %p264 = scmp.ne.s32.totalorder %s256, %s258
      %p265 = scmp.eq.s32.totalorder %s38, 5
      %p266 = por %p264, %p265
      %p267 = scmp.ne.s32.totalorder %s258, %s259
      %p268 = scmp.eq.s32.totalorder %s38, 0
      %p269 = por %p267, %p268
      %p270 = scmp.ne.s32.totalorder %s258, %s259
      %p271 = scmp.eq.s32.totalorder %s39, 5
      %p272 = por %p270, %p271
      %p274 = scmp.ne.s32.totalorder %s259, %s273
      %p275 = scmp.eq.s32.totalorder %s39, 0
      %p276 = por %p274, %p275
      %s277 = ssub.s32 %s33, %s40
      %p278 = scmp.eq.s32.totalorder %s277, 0
      %s280 = sadd.s32 %s279, 1
      %s281 = scalar_select %p278, %s279, %s280
      %p284 = pneg %p278
      %p285 = scmp.eq.s32.totalorder %s33, 5
      %p286 = por %p284, %p285
      %p287 = scmp.ne.s32.totalorder %s279, %s282
      %p288 = scmp.eq.s32.totalorder %s33, 0
      %p289 = por %p287, %p288
      %p290 = scmp.ne.s32.totalorder %s279, %s282
      %p291 = scmp.eq.s32.totalorder %s38, 5
      %p292 = por %p290, %p291
      %p293 = scmp.ne.s32.totalorder %s282, %s283
      %p294 = scmp.eq.s32.totalorder %s38, 0
      %p295 = por %p293, %p294
      %p296 = scmp.ne.s32.totalorder %s282, %s283
      %p297 = scmp.eq.s32.totalorder %s39, 5
      %p298 = por %p296, %p297
      %p300 = scmp.ne.s32.totalorder %s283, %s299
      %p301 = scmp.eq.s32.totalorder %s39, 0
      %p302 = por %p300, %p301
      %s303 = ssub.s32 %s33, %s40
      %p304 = scmp.eq.s32.totalorder %s303, 0
      %s306 = sadd.s32 %s305, 1
      %s307 = scalar_select %p304, %s305, %s306
      %p310 = pneg %p304
      %p311 = scmp.eq.s32.totalorder %s33, 5
      %p312 = por %p310, %p311
      %p313 = scmp.ne.s32.totalorder %s305, %s308
      %p314 = scmp.eq.s32.totalorder %s33, 0
      %p315 = por %p313, %p314
      %p316 = scmp.ne.s32.totalorder %s305, %s308
      %p317 = scmp.eq.s32.totalorder %s38, 5
      %p318 = por %p316, %p317
      %p319 = scmp.ne.s32.totalorder %s308, %s309
      %p320 = scmp.eq.s32.totalorder %s38, 0
      %p321 = por %p319, %p320
      %p322 = scmp.ne.s32.totalorder %s308, %s309
      %p323 = scmp.eq.s32.totalorder %s39, 5
      %p324 = por %p322, %p323
      %p326 = scmp.ne.s32.totalorder %s309, %s325
      %p327 = scmp.eq.s32.totalorder %s39, 0
      %p328 = por %p326, %p327
      %s330 = sadd.s32 %s329, 1
      %p333 = scmp.eq.s32.totalorder %s33, 5
      %p334 = scmp.ne.s32.totalorder %s329, %s331
      %p335 = scmp.eq.s32.totalorder %s33, 0
      %p336 = por %p334, %p335
      %p337 = scmp.ne.s32.totalorder %s329, %s331
      %p338 = scmp.eq.s32.totalorder %s38, 5
      %p339 = por %p337, %p338
      %p340 = scmp.ne.s32.totalorder %s331, %s332
      %p341 = scmp.eq.s32.totalorder %s38, 0
      %p342 = por %p340, %p341
      %p343 = scmp.ne.s32.totalorder %s331, %s332
      %p344 = scmp.eq.s32.totalorder %s39, 5
      %p345 = por %p343, %p344
      %p347 = scmp.ne.s32.totalorder %s332, %s346
      %p348 = scmp.eq.s32.totalorder %s39, 0
      %p349 = por %p347, %p348
      %s351 = sadd.s32 %s350, 1
      %p354 = scmp.eq.s32.totalorder %s33, 5
      %p355 = scmp.ne.s32.totalorder %s350, %s352
      %p356 = scmp.eq.s32.totalorder %s33, 0
      %p357 = por %p355, %p356
      %p358 = scmp.ne.s32.totalorder %s350, %s352
      %p359 = scmp.eq.s32.totalorder %s38, 5
      %p360 = por %p358, %p359
      %p361 = scmp.ne.s32.totalorder %s352, %s353
      %p362 = scmp.eq.s32.totalorder %s38, 0
      %p363 = por %p361, %p362
      %p364 = scmp.ne.s32.totalorder %s352, %s353
      %p365 = scmp.eq.s32.totalorder %s39, 5
      %p366 = por %p364, %p365
      %p368 = scmp.ne.s32.totalorder %s353, %s367
      %p369 = scmp.eq.s32.totalorder %s39, 0
      %p370 = por %p368, %p369
      %p371 = scmp.le.s32.totalorder 1, %s33
      %p372 = scmp.lt.s32.totalorder %s33, 7
      %p373 = pnand %p371, %p372
      %p374 = pneg %p373
      // Predicated region
      $region9: #{tpu_custom_call.1} parent=5 // pred_check
        _
      $region10: #{tpu_custom_call.1} parent=5 // pred_check_branch
        %376 = sbr.rel (%p373) target = $region12
      $region11: #{tpu_custom_call.1} parent=5 // pred_region
        %s377 = ssub.s32 %s33, 1
        // Predicated region
        $region13: #{tpu_custom_call.1} parent=11 // pred_check
          %p378 = pneg %p80
        $region14: #{tpu_custom_call.1} parent=11 // pred_check_branch
          %380 = sbr.rel (%p378) target = $region16
        $region15: #{tpu_custom_call.1} parent=11 // pred_region
          _
        $region16: #{tpu_custom_call.1} parent=11 // pred_fallthru
          _
        // Predicated region
        $region17: #{tpu_custom_call.1} parent=11 // pred_check
          %p381 = pneg %p101
        $region18: #{tpu_custom_call.1} parent=11 // pred_check_branch
          %383 = sbr.rel (%p381) target = $region20
        $region19: #{tpu_custom_call.1} parent=11 // pred_region
          %385 = vsyncadd [#allocation8], 0
          %s387 = sshll.u32 %s2, 4
          %s388 = int_to_ptr.hbm [resolvable:$true] %s387
          %s389 = sshll.u32 [#allocation7], 4
          %s390 = int_to_ptr.vmem [resolvable:$true] %s389
          %392 = dma.hbm_to_vmem [thread:$0]  %s388, 128, %s390, [#allocation8]
        $region20: #{tpu_custom_call.1} parent=11 // pred_fallthru
          _
        // Predicated region
        $region21: #{tpu_custom_call.1} parent=11 // pred_check
          %p393 = pneg %p122
        $region22: #{tpu_custom_call.1} parent=11 // pred_check_branch
          %395 = sbr.rel (%p393) target = $region24
        $region23: #{tpu_custom_call.1} parent=11 // pred_region
          %397 = vsyncadd [#allocation8], 0
          %s398 = sshll.u32 %s3, 4
          %s399 = int_to_ptr.hbm [resolvable:$true] %s398
          %s400 = sshll.u32 [#allocation9], 4
          %s401 = int_to_ptr.vmem [resolvable:$true] %s400
          %406 = dma.hbm_to_vmem [thread:$0]  %s399, 1024, %s401, [#allocation8], 128, 128, 8
        $region24: #{tpu_custom_call.1} parent=11 // pred_fallthru
          _
        // Predicated region
        $region25: #{tpu_custom_call.1} parent=11 // pred_check
          %p407 = pneg %p143
        $region26: #{tpu_custom_call.1} parent=11 // pred_check_branch
          %409 = sbr.rel (%p407) target = $region28
        $region27: #{tpu_custom_call.1} parent=11 // pred_region
          %411 = vsyncadd [#allocation11], 0
          %s412 = sshll.u32 %s4, 4
          %s413 = int_to_ptr.hbm [resolvable:$true] %s412
          %s414 = sshll.u32 [#allocation10], 4
          %s415 = int_to_ptr.vmem [resolvable:$true] %s414
          %420 = dma.hbm_to_vmem [thread:$0]  %s413, 1024, %s415, [#allocation11], 128, 128, 8
        $region28: #{tpu_custom_call.1} parent=11 // pred_fallthru
          _
        // Predicated region
        $region29: #{tpu_custom_call.1} parent=11 // pred_check
          %p421 = pneg %p164
        $region30: #{tpu_custom_call.1} parent=11 // pred_check_branch
          %423 = sbr.rel (%p421) target = $region32
        $region31: #{tpu_custom_call.1} parent=11 // pred_region
          _
        $region32: #{tpu_custom_call.1} parent=11 // pred_fallthru
          _
        // Predicated region
        $region33: #{tpu_custom_call.1} parent=11 // pred_check
          %p424 = pneg %p185
        $region34: #{tpu_custom_call.1} parent=11 // pred_check_branch
          %426 = sbr.rel (%p424) target = $region36
        $region35: #{tpu_custom_call.1} parent=11 // pred_region
          _
        $region36: #{tpu_custom_call.1} parent=11 // pred_fallthru
          _
        // Predicated region
        $region37: #{tpu_custom_call.1} parent=11 // pred_check
          %p427 = pneg %p206
        $region38: #{tpu_custom_call.1} parent=11 // pred_check_branch
          %429 = sbr.rel (%p427) target = $region40
        $region39: #{tpu_custom_call.1} parent=11 // pred_region
          %431 = vsyncadd [#allocation11], 0
          %s432 = sshll.u32 %s7, 4
          %s433 = int_to_ptr.hbm [resolvable:$true] %s432
          %s434 = sshll.u32 [#allocation12], 4
          %s435 = int_to_ptr.vmem [resolvable:$true] %s434
          %440 = dma.hbm_to_vmem [thread:$0]  %s433, 640, %s435, [#allocation11], 64, 64, 4
        $region40: #{tpu_custom_call.1} parent=11 // pred_fallthru
          _
        // Predicated region
        $region41: #{tpu_custom_call.1} parent=11 // pred_check
          %p441 = pneg %p227
        $region42: #{tpu_custom_call.1} parent=11 // pred_check_branch
          %443 = sbr.rel (%p441) target = $region44
        $region43: #{tpu_custom_call.1} parent=11 // pred_region
          _
        $region44: #{tpu_custom_call.1} parent=11 // pred_fallthru
          _
        // Predicated region
        $region45: #{tpu_custom_call.1} parent=11 // pred_check
          %p444 = pneg %p248
        $region46: #{tpu_custom_call.1} parent=11 // pred_check_branch
          %446 = sbr.rel (%p444) target = $region48
        $region47: #{tpu_custom_call.1} parent=11 // pred_region
          _
        $region48: #{tpu_custom_call.1} parent=11 // pred_fallthru
          _
        // Predicated region
        $region49: #{tpu_custom_call.1} parent=11 // pred_check
          %p447 = pneg %p269
        $region50: #{tpu_custom_call.1} parent=11 // pred_check_branch
          %449 = sbr.rel (%p447) target = $region52
        $region51: #{tpu_custom_call.1} parent=11 // pred_region
          _
        $region52: #{tpu_custom_call.1} parent=11 // pred_fallthru
          _
      $region12: #{tpu_custom_call.1} parent=5 // pred_fallthru
        _
      %p450 = scmp.lt.s32.totalorder %s33, 6
      // Predicated region
      $region53: #{tpu_custom_call.1} parent=5 // pred_check
        %p451 = pneg %p450
      $region54: #{tpu_custom_call.1} parent=5 // pred_check_branch
        %453 = sbr.rel (%p451) target = $region56
      $region55: #{tpu_custom_call.1} parent=5 // pred_region
        // Predicated region
        $region57: #{tpu_custom_call.1} parent=55 // pred_check
          %p454 = pneg %p53
        $region58: #{tpu_custom_call.1} parent=55 // pred_check_branch
          %456 = sbr.rel (%p454) target = $region60
        $region59: #{tpu_custom_call.1} parent=55 // pred_region
          %s457 = sand.u32 %s43, 1
          %s458 = scalar_lea.sflag [#allocation5], %s457
          %s459 = sand.u32 %s43, 1
          %s460 = smul.addr %s459, 8
          %s461 = scalar_lea.vmem [#allocation4], %s460
          %463 = vsyncadd %s458, 0
          %s464 = smul.addr %s33, 8
          %s465 = scalar_lea.hbm %s0, %s464
          %s467 = sshll.u32 %s465, 4
          %s468 = int_to_ptr.hbm [resolvable:$true] %s467
          %s469 = sshll.u32 %s461, 4
          %s470 = int_to_ptr.vmem [resolvable:$true] %s469
          %472 = dma.hbm_to_vmem [thread:$0]  %s468, 128, %s470, %s458
        $region60: #{tpu_custom_call.1} parent=55 // pred_fallthru
          _
      $region56: #{tpu_custom_call.1} parent=5 // pred_fallthru
        _
      %p473 = scmp.le.s32.totalorder 1, %s33
      %p474 = scmp.lt.s32.totalorder %s33, 7
      %p475 = pnand %p473, %p474
      %p476 = pneg %p475
      // Predicated region
      $region61: #{tpu_custom_call.1} parent=5 // pred_check
        _
      $region62: #{tpu_custom_call.1} parent=5 // pred_check_branch
        %478 = sbr.rel (%p475) target = $region64
      $region63: #{tpu_custom_call.1} parent=5 // pred_region
        %s479 = ssub.s32 %s33, 1
        %s480 = sand.u32 %s46, 1
        %s481 = scalar_lea.sflag [#allocation5], %s480
        %s482 = sand.u32 %s46, 1
        %s483 = smul.addr %s482, 8
        %s484 = scalar_lea.vmem [#allocation4], %s483
        // Predicated region
        $region65: #{tpu_custom_call.1} parent=63 // pred_check
          %p485 = pneg %p59
        $region66: #{tpu_custom_call.1} parent=63 // pred_check_branch
          %487 = sbr.rel (%p485) target = $region68
        $region67: #{tpu_custom_call.1} parent=63 // pred_region
          %489 = dma.done %s481, 128
        $region68: #{tpu_custom_call.1} parent=63 // pred_fallthru
          _
        // Predicated region
        $region69: #{tpu_custom_call.1} parent=63 // pred_check
          %p490 = pneg %p101
        $region70: #{tpu_custom_call.1} parent=63 // pred_check_branch
          %492 = sbr.rel (%p490) target = $region72
        $region71: #{tpu_custom_call.1} parent=63 // pred_region
          %494 = dma.done [#allocation8], 128
        $region72: #{tpu_custom_call.1} parent=63 // pred_fallthru
          _
        // Predicated region
        $region73: #{tpu_custom_call.1} parent=63 // pred_check
          %p495 = pneg %p122
        $region74: #{tpu_custom_call.1} parent=63 // pred_check_branch
          %497 = sbr.rel (%p495) target = $region76
        $region75: #{tpu_custom_call.1} parent=63 // pred_region
          %499 = dma.done [#allocation8], 1024
        $region76: #{tpu_custom_call.1} parent=63 // pred_fallthru
          _
        // Predicated region
        $region77: #{tpu_custom_call.1} parent=63 // pred_check
          %p500 = pneg %p143
        $region78: #{tpu_custom_call.1} parent=63 // pred_check_branch
          %502 = sbr.rel (%p500) target = $region80
        $region79: #{tpu_custom_call.1} parent=63 // pred_region
          %504 = dma.done [#allocation11], 1024
        $region80: #{tpu_custom_call.1} parent=63 // pred_fallthru
          _
        // Predicated region
        $region81: #{tpu_custom_call.1} parent=63 // pred_check
          %p505 = pneg %p206
        $region82: #{tpu_custom_call.1} parent=63 // pred_check_branch
          %507 = sbr.rel (%p505) target = $region84
        $region83: #{tpu_custom_call.1} parent=63 // pred_region
          %509 = dma.done [#allocation11], 640
        $region84: #{tpu_custom_call.1} parent=63 // pred_fallthru
          _
        %s510 = sand.u32 %s46, 1
        %s511 = scalar_lea.sflag [#allocation5], %s510
        %s512 = sand.u32 %s46, 1
        %s513 = smul.addr %s512, 8
        %s514 = scalar_lea.vmem [#allocation4], %s513
        %p515 = pneg %p59
        %p516 = pneg %p56
        %p517 = pneg %p80
        %p518 = pneg %p77
        %p519 = pneg %p101
        %p520 = pneg %p98
        %p521 = pneg %p122
        %p522 = pneg %p119
        %p523 = pneg %p143
        %p524 = pneg %p140
        %p525 = pneg %p164
        %p526 = pneg %p161
        %p527 = pneg %p185
        %p528 = pneg %p182
        %p529 = pneg %p206
        %p530 = pneg %p203
        %p531 = pneg %p227
        %p532 = pneg %p224
        %p533 = pneg %p248
        %p534 = pneg %p245
        %p535 = pneg %p269
        %p536 = pneg %p266
        %p537 = pneg %p295
        %p538 = pneg %p292
        %s539 = sand.u32 %s282, 1
        %s540 = scalar_lea.sflag [#allocation6], %s539
        %s541 = sand.u32 %s282, 1
        %s542 = smul.addr %s541, 8
        %s543 = scalar_lea.vmem [#allocation13], %s542
        %p544 = pneg %p321
        %p545 = pneg %p318
        %s546 = sand.u32 %s38, 1
        %s547 = scalar_lea.sflag [#allocation15], %s546
        %s548 = sand.u32 %s308, 1
        %s549 = smul.addr %s548, 8
        %s550 = scalar_lea.vmem [#allocation14], %s549
        %p551 = pneg %p342
        %p552 = pneg %p339
        %p553 = pneg %p363
        %p554 = pneg %p360
        %p556 = scmp.eq.s32.totalorder %s38, 0
        // Predicated region
        $region85: #{tpu_custom_call.1} parent=63 // pred_check
          %p557 = pneg %p556
        $region86: #{tpu_custom_call.1} parent=63 // pred_check_branch
          %559 = sbr.rel (%p557) target = $region88
        $region87: #{tpu_custom_call.1} parent=63 // pred_region
          %v560 = vld [vmem:[%s1] sm:$0xff]
          %vm561 = vcmask 261120
          %562 = vst.msk [vmem:[#allocation2] sm:$0xff] %vm561, %v560
          %v563 = vld [vmem:[#allocation7] sm:$0xff]
          %564 = vst.msk [vmem:[#allocation3] sm:$0xff] %vm561, %v563
        $region88: #{tpu_custom_call.1} parent=63 // pred_fallthru
          _
        %v565 = vld [vmem:[#allocation2] sm:$0xff]
        %v566 = vld [vmem:[#allocation3] sm:$0xff]
        %v567 = vld [vmem:[%s484] sm:$0xff]
        %v568 = vld [vmem:[#allocation9] sm:$0xff]
        %v569 = vld [vmem:[#allocation9 + $0x8] sm:$0xff]
        %v570 = vld [vmem:[#allocation9 + $0x10] sm:$0xff]
        %v571 = vld [vmem:[#allocation9 + $0x18] sm:$0xff]
        %v572 = vld [vmem:[#allocation9 + $0x20] sm:$0xff]
        %v573 = vld [vmem:[#allocation9 + $0x28] sm:$0xff]
        %v574 = vld [vmem:[#allocation9 + $0x30] sm:$0xff]
        %v575 = vld [vmem:[#allocation9 + $0x38] sm:$0xff]
        %v576 = vpack.c.bf16 %v565, %v565
        %v577 = vld [vmem:[%s5] sm:$0xf]
        %v578 = vld [vmem:[%s5 + $0x4] sm:$0xf]
        %v579 = vld [vmem:[%s5 + $0x8] sm:$0xf]
        %v580 = vld [vmem:[%s5 + $0xc] sm:$0xf]
        %v585 = vunpack.c.l.b16 %v577
        %v586 = vunpack.c.l.b16 %v578
        %v587 = vunpack.c.l.b16 %v579
        %v588 = vunpack.c.l.b16 %v580
        %v589 = vpack.c.b16 %v586, %v585
        %v590 = vpack.c.b16 %v588, %v587
        %vm593 = vcmask 261120
        %v595 = vsel %vm593, %v576, 0
        %597 = vmatpush.bf16.msra.mxu0 0
        %598 = vmatpush.bf16.msra.mxu0 0
        %599 = vmatpush.bf16.msra.mxu0 0
        %600 = vmatpush.bf16.msra.mxu0 0
        %601 = vmatpush.bf16.msra.mxu0 0
        %602 = vmatpush.bf16.msra.mxu0 0
        %603 = vmatpush.bf16.msra.mxu0 %v590
        %604 = vmatpush.bf16.msra.mxu0 %v589
        %605 = vmatmul.bf16.gmra.mxu0 %v595
        %v606 = vpop.f32.mrf.mxu0
        %v607 = vadd.f32 0.0, %v606
        %v608 = vpop.f32.mrf.mxu0
        %609 = vdwg.mxu0
        %v610 = vld [vmem:[#allocation10] sm:$0xff]
        %v611 = vld [vmem:[#allocation10 + $0x8] sm:$0xff]
        %v612 = vld [vmem:[#allocation10 + $0x10] sm:$0xff]
        %v613 = vld [vmem:[#allocation10 + $0x18] sm:$0xff]
        %v614 = vld [vmem:[#allocation10 + $0x20] sm:$0xff]
        %v615 = vld [vmem:[#allocation10 + $0x28] sm:$0xff]
        %v616 = vld [vmem:[#allocation10 + $0x30] sm:$0xff]
        %v617 = vld [vmem:[#allocation10 + $0x38] sm:$0xff]
        %v619 = vrot.slane %v607, 1
        %v620 = vrot.slane %v607, 2
        %v621 = vrot.slane %v607, 3
        %v622 = vrot.slane %v607, 4
        %v623 = vrot.slane %v607, 5
        %v624 = vrot.slane %v607, 6
        %v625 = vrot.slane %v607, 7
        %v626 = vperm.slane %v607, 0
        %v627 = vperm.slane %v619, 0
        %v628 = vperm.slane %v620, 0
        %v629 = vperm.slane %v621, 0
        %v630 = vperm.slane %v622, 0
        %v631 = vperm.slane %v623, 0
        %v632 = vperm.slane %v624, 0
        %v633 = vperm.slane %v625, 0
        %v642 = vadd.f32 %v610, %v626
        %v643 = vadd.f32 %v611, %v627
        %v644 = vadd.f32 %v612, %v628
        %v645 = vadd.f32 %v613, %v629
        %v646 = vadd.f32 %v614, %v630
        %v647 = vadd.f32 %v615, %v631
        %v648 = vadd.f32 %v616, %v632
        %v649 = vadd.f32 %v617, %v633
        %v650 = vtanh.pop %v642
        %v651 = vtanh.pop %v643
        %v652 = vtanh.pop %v644
        %v653 = vtanh.pop %v645
        %v654 = vtanh.pop %v646
        %v655 = vtanh.pop %v647
        %v656 = vtanh.pop %v648
        %v657 = vtanh.pop %v649
        %v658 = vld [vmem:[%s6] sm:$0x1]
        %v660 = vperm.slane %v658, 0
        %v662 = vmul.f32 %v650, %v660
        %v663 = vmul.f32 %v651, %v660
        %v664 = vmul.f32 %v652, %v660
        %v665 = vmul.f32 %v653, %v660
        %v666 = vmul.f32 %v654, %v660
        %v667 = vmul.f32 %v655, %v660
        %v668 = vmul.f32 %v656, %v660
        %v669 = vmul.f32 %v657, %v660
        %vm670 = vcmask 130048
        %v671 = vsel %vm670, %v662, 0.0
        %672 = vadd.xlane.f32.xlu0 %v671
        %v673 = vpop.xlane.xlu0 %672
        %v674 = vsel %vm670, %v663, 0.0
        %675 = vadd.xlane.f32.xlu0 %v674
        %v676 = vpop.xlane.xlu0 %675
        %v677 = vsel %vm670, %v664, 0.0
        %678 = vadd.xlane.f32.xlu0 %v677
        %v679 = vpop.xlane.xlu0 %678
        %v680 = vsel %vm670, %v665, 0.0
        %681 = vadd.xlane.f32.xlu0 %v680
        %v682 = vpop.xlane.xlu0 %681
        %v683 = vsel %vm670, %v666, 0.0
        %684 = vadd.xlane.f32.xlu0 %v683
        %v685 = vpop.xlane.xlu0 %684
        %v686 = vsel %vm670, %v667, 0.0
        %687 = vadd.xlane.f32.xlu0 %v686
        %v688 = vpop.xlane.xlu0 %687
        %v689 = vsel %vm670, %v668, 0.0
        %690 = vadd.xlane.f32.xlu0 %v689
        %v691 = vpop.xlane.xlu0 %690
        %v692 = vsel %vm670, %v669, 0.0
        %693 = vadd.xlane.f32.xlu0 %v692
        %v694 = vpop.xlane.xlu0 %693
        %v703 = vlaneseq
        %v704 = vand.u32 %v703, 127
        %v705 = vperm.slane %v673, %v704
        %v706 = vperm.slane %v676, %v704
        %v707 = vperm.slane %v679, %v704
        %v708 = vperm.slane %v682, %v704
        %v709 = vperm.slane %v685, %v704
        %v710 = vperm.slane %v688, %v704
        %v711 = vperm.slane %v691, %v704
        %v712 = vperm.slane %v694, %v704
        %vm713 = vcmask 1041409
        %v714 = vsel %vm713, %v706, %v705
        %vm715 = vcmask 1042434
        %v716 = vsel %vm715, %v707, %v714
        %vm717 = vcmask 1043459
        %v718 = vsel %vm717, %v708, %v716
        %vm719 = vcmask 1044484
        %v720 = vsel %vm719, %v709, %v718
        %vm721 = vcmask 1045509
        %v722 = vsel %vm721, %v710, %v720
        %vm723 = vcmask 1046534
        %v724 = vsel %vm723, %v711, %v722
        %vm725 = vcmask 1047559
        %v726 = vsel %vm725, %v712, %v724
        %vm728 = vcmask 64512
        %v729 = vsel %vm728, %v726, -inf
        %730 = vmax.xlane.f32.xlu0 %v729
        %v731 = vpop.xlane.xlu0 %730
        %v733 = vperm.slane %v731, 0
        %v734 = vperm.slane %v731, 1
        %v735 = vperm.slane %v731, 2
        %v736 = vperm.slane %v731, 3
        %v737 = vperm.slane %v731, 4
        %v738 = vperm.slane %v731, 5
        %v739 = vperm.slane %v731, 6
        %v740 = vperm.slane %v731, 7
        %v749 = vsub.f32 %v673, %v733
        %v750 = vsub.f32 %v676, %v734
        %v751 = vsub.f32 %v679, %v735
        %v752 = vsub.f32 %v682, %v736
        %v753 = vsub.f32 %v685, %v737
        %v754 = vsub.f32 %v688, %v738
        %v755 = vsub.f32 %v691, %v739
        %v756 = vsub.f32 %v694, %v740
        %v757 = vmul.f32 %v749, 1.442695
        %v758 = vpow.pop %v757
        %v759 = vmul.f32 %v750, 1.442695
        %v760 = vpow.pop %v759
        %v761 = vmul.f32 %v751, 1.442695
        %v762 = vpow.pop %v761
        %v763 = vmul.f32 %v752, 1.442695
        %v764 = vpow.pop %v763
        %v765 = vmul.f32 %v753, 1.442695
        %v766 = vpow.pop %v765
        %v767 = vmul.f32 %v754, 1.442695
        %v768 = vpow.pop %v767
        %v769 = vmul.f32 %v755, 1.442695
        %v770 = vpow.pop %v769
        %v771 = vmul.f32 %v756, 1.442695
        %v772 = vpow.pop %v771
        %781 = vset.pattern.permute.xlu0 0
        %782 = vperm.xlu0 %781, %v758
        %v783 = vpop.permute.xlu0 %782
        %784 = vset.pattern.permute.xlu0 0
        %785 = vperm.xlu0 %784, %v760
        %v786 = vpop.permute.xlu0 %785
        %787 = vset.pattern.permute.xlu0 0
        %788 = vperm.xlu0 %787, %v762
        %v789 = vpop.permute.xlu0 %788
        %790 = vset.pattern.permute.xlu0 0
        %791 = vperm.xlu0 %790, %v764
        %v792 = vpop.permute.xlu0 %791
        %793 = vset.pattern.permute.xlu0 0
        %794 = vperm.xlu0 %793, %v766
        %v795 = vpop.permute.xlu0 %794
        %796 = vset.pattern.permute.xlu0 0
        %797 = vperm.xlu0 %796, %v768
        %v798 = vpop.permute.xlu0 %797
        %799 = vset.pattern.permute.xlu0 0
        %800 = vperm.xlu0 %799, %v770
        %v801 = vpop.permute.xlu0 %800
        %802 = vset.pattern.permute.xlu0 0
        %803 = vperm.xlu0 %802, %v772
        %v804 = vpop.permute.xlu0 %803
        %v805 = vperm.slane %v783, %v704
        %v806 = vperm.slane %v786, %v704
        %v807 = vperm.slane %v789, %v704
        %v808 = vperm.slane %v792, %v704
        %v809 = vperm.slane %v795, %v704
        %v810 = vperm.slane %v798, %v704
        %v811 = vperm.slane %v801, %v704
        %v812 = vperm.slane %v804, %v704
        %v813 = vsel %vm713, %v806, %v805
        %v814 = vsel %vm715, %v807, %v813
        %v815 = vsel %vm717, %v808, %v814
        %v816 = vsel %vm719, %v809, %v815
        %v817 = vsel %vm721, %v810, %v816
        %v818 = vsel %vm723, %v811, %v817
        %v819 = vsel %vm725, %v812, %v818
        %v821 = vsel %vm728, %v819, 0.0
        %822 = vadd.xlane.f32.xlu0 %v821
        %v823 = vpop.xlane.xlu0 %822
        %v824 = vrcp.pop %v823
        %v826 = vperm.slane %v824, 0
        %v827 = vperm.slane %v824, 1
        %v828 = vperm.slane %v824, 2
        %v829 = vperm.slane %v824, 3
        %v830 = vperm.slane %v824, 4
        %v831 = vperm.slane %v824, 5
        %v832 = vperm.slane %v824, 6
        %v833 = vperm.slane %v824, 7
        %v842 = vmul.f32 %v758, %v826
        %v843 = vmul.f32 %v760, %v827
        %v844 = vmul.f32 %v762, %v828
        %v845 = vmul.f32 %v764, %v829
        %v846 = vmul.f32 %v766, %v830
        %v847 = vmul.f32 %v768, %v831
        %v848 = vmul.f32 %v770, %v832
        %v849 = vmul.f32 %v772, %v833
        %858 = vset.pattern.permute.xlu0 0
        %859 = vperm.xlu0 %858, %v842
        %v860 = vpop.permute.xlu0 %859
        %861 = vset.pattern.permute.xlu0 0
        %862 = vperm.xlu0 %861, %v843
        %v863 = vpop.permute.xlu0 %862
        %864 = vset.pattern.permute.xlu0 0
        %865 = vperm.xlu0 %864, %v844
        %v866 = vpop.permute.xlu0 %865
        %867 = vset.pattern.permute.xlu0 0
        %868 = vperm.xlu0 %867, %v845
        %v869 = vpop.permute.xlu0 %868
        %870 = vset.pattern.permute.xlu0 0
        %871 = vperm.xlu0 %870, %v846
        %v872 = vpop.permute.xlu0 %871
        %873 = vset.pattern.permute.xlu0 0
        %874 = vperm.xlu0 %873, %v847
        %v875 = vpop.permute.xlu0 %874
        %876 = vset.pattern.permute.xlu0 0
        %877 = vperm.xlu0 %876, %v848
        %v878 = vpop.permute.xlu0 %877
        %879 = vset.pattern.permute.xlu0 0
        %880 = vperm.xlu0 %879, %v849
        %v881 = vpop.permute.xlu0 %880
        %v882 = vperm.slane %v860, %v704
        %v883 = vperm.slane %v863, %v704
        %v884 = vperm.slane %v866, %v704
        %v885 = vperm.slane %v869, %v704
        %v886 = vperm.slane %v872, %v704
        %v887 = vperm.slane %v875, %v704
        %v888 = vperm.slane %v878, %v704
        %v889 = vperm.slane %v881, %v704
        %v890 = vsel %vm713, %v883, %v882
        %v891 = vsel %vm715, %v884, %v890
        %v892 = vsel %vm717, %v885, %v891
        %v893 = vsel %vm719, %v886, %v892
        %v894 = vsel %vm721, %v887, %v893
        %v895 = vsel %vm723, %v888, %v894
        %v896 = vsel %vm725, %v889, %v895
        %898 = vst.msk [vmem:[%s550] sm:$0xff] %vm728, %v896
        %v907 = vmul.f32 %v568, %v860
        %v908 = vmul.f32 %v569, %v863
        %v909 = vmul.f32 %v570, %v866
        %v910 = vmul.f32 %v571, %v869
        %v911 = vmul.f32 %v572, %v872
        %v912 = vmul.f32 %v573, %v875
        %v913 = vmul.f32 %v574, %v878
        %v914 = vmul.f32 %v575, %v881
        %v915 = vsel %vm670, %v907, 0.0
        %v916 = vrot.slane %v915, 4
        %v917 = vadd.f32 %v915, %v916
        %v918 = vrot.slane %v917, 2
        %v919 = vadd.f32 %v917, %v918
        %v920 = vrot.slane %v919, 1
        %v921 = vadd.f32 %v919, %v920
        %v922 = vsel %vm670, %v908, 0.0
        %v923 = vrot.slane %v922, 4
        %v924 = vadd.f32 %v922, %v923
        %v925 = vrot.slane %v924, 2
        %v926 = vadd.f32 %v924, %v925
        %v927 = vrot.slane %v926, 1
        %v928 = vadd.f32 %v926, %v927
        %v929 = vsel %vm670, %v909, 0.0
        %v930 = vrot.slane %v929, 4
        %v931 = vadd.f32 %v929, %v930
        %v932 = vrot.slane %v931, 2
        %v933 = vadd.f32 %v931, %v932
        %v934 = vrot.slane %v933, 1
        %v935 = vadd.f32 %v933, %v934
        %v936 = vsel %vm670, %v910, 0.0
        %v937 = vrot.slane %v936, 4
        %v938 = vadd.f32 %v936, %v937
        %v939 = vrot.slane %v938, 2
        %v940 = vadd.f32 %v938, %v939
        %v941 = vrot.slane %v940, 1
        %v942 = vadd.f32 %v940, %v941
        %v943 = vsel %vm670, %v911, 0.0
        %v944 = vrot.slane %v943, 4
        %v945 = vadd.f32 %v943, %v944
        %v946 = vrot.slane %v945, 2
        %v947 = vadd.f32 %v945, %v946
        %v948 = vrot.slane %v947, 1
        %v949 = vadd.f32 %v947, %v948
        %v950 = vsel %vm670, %v912, 0.0
        %v951 = vrot.slane %v950, 4
        %v952 = vadd.f32 %v950, %v951
        %v953 = vrot.slane %v952, 2
        %v954 = vadd.f32 %v952, %v953
        %v955 = vrot.slane %v954, 1
        %v956 = vadd.f32 %v954, %v955
        %v957 = vsel %vm670, %v913, 0.0
        %v958 = vrot.slane %v957, 4
        %v959 = vadd.f32 %v957, %v958
        %v960 = vrot.slane %v959, 2
        %v961 = vadd.f32 %v959, %v960
        %v962 = vrot.slane %v961, 1
        %v963 = vadd.f32 %v961, %v962
        %v964 = vsel %vm670, %v914, 0.0
        %v965 = vrot.slane %v964, 4
        %v966 = vadd.f32 %v964, %v965
        %v967 = vrot.slane %v966, 2
        %v968 = vadd.f32 %v966, %v967
        %v969 = vrot.slane %v968, 1
        %v970 = vadd.f32 %v968, %v969
        %v979 = vsel %vm713, %v928, %v921
        %v980 = vsel %vm715, %v935, %v979
        %v981 = vsel %vm717, %v942, %v980
        %v982 = vsel %vm719, %v949, %v981
        %v983 = vsel %vm721, %v956, %v982
        %v984 = vsel %vm723, %v963, %v983
        %v985 = vsel %vm725, %v970, %v984
        %986 = vrot.lane.b32.xlu0 %v985, 32
        %v987 = vpop.permute.xlu0 %986
        %990 = vrot.lane.b32.xlu0 %v565, 48
        %v991 = vpop.permute.xlu0 %990
        %v993 = vsel %vm593, %v567, %v987
        %vm994 = vcmask 392192
        %v995 = vsel %vm994, %v993, %v991
        %v996 = vpack.c.bf16 %v995, %v995
        %v997 = vld [vmem:[#allocation12] sm:$0xf]
        %v998 = vld [vmem:[#allocation12 + $0x4] sm:$0xf]
        %v999 = vld [vmem:[#allocation12 + $0x8] sm:$0xf]
        %v1000 = vld [vmem:[#allocation12 + $0xc] sm:$0xf]
        %v1001 = vld [vmem:[#allocation12 + $0x10] sm:$0xf]
        %v1002 = vld [vmem:[#allocation12 + $0x14] sm:$0xf]
        %v1003 = vld [vmem:[#allocation12 + $0x18] sm:$0xf]
        %v1004 = vld [vmem:[#allocation12 + $0x1c] sm:$0xf]
        %v1005 = vld [vmem:[#allocation12 + $0x20] sm:$0xf]
        %v1006 = vld [vmem:[#allocation12 + $0x24] sm:$0xf]
        %v1007 = vld [vmem:[%s8] sm:$0x1]
        %v1009 = vperm.slane %v1007, 0
        %v1021 = vunpack.c.l.b16 %v997
        %v1022 = vunpack.c.l.b16 %v998
        %v1023 = vunpack.c.l.b16 %v999
        %v1024 = vunpack.c.l.b16 %v1000
        %v1025 = vunpack.c.l.b16 %v1001
        %v1026 = vunpack.c.l.b16 %v1002
        %v1027 = vunpack.c.l.b16 %v1003
        %v1028 = vunpack.c.l.b16 %v1004
        %v1029 = vunpack.c.l.b16 %v1005
        %v1030 = vunpack.c.l.b16 %v1006
        %v1031 = vpack.c.b16 %v1022, %v1021
        %v1032 = vpack.c.b16 %v1024, %v1023
        %v1033 = vpack.c.b16 %v1026, %v1025
        %v1034 = vpack.c.b16 %v1028, %v1027
        %v1035 = vpack.c.b16 %v1030, %v1029
        %vm1041 = vcmask 654336
        %v1043 = vsel %vm1041, %v996, 0
        %1045 = vmatpush.bf16.msra.mxu0 0
        %1046 = vmatpush.bf16.msra.mxu0 0
        %1047 = vmatpush.bf16.msra.mxu0 0
        %1048 = vmatpush.bf16.msra.mxu0 %v1035
        %1049 = vmatpush.bf16.msra.mxu0 %v1034
        %1050 = vmatpush.bf16.msra.mxu0 %v1033
        %1051 = vmatpush.bf16.msra.mxu0 %v1032
        %1052 = vmatpush.bf16.msra.mxu0 %v1031
        %1053 = vmatmul.bf16.gmra.mxu0 %v1043
        %v1054 = vpop.f32.mrf.mxu0
        %v1055 = vadd.f32 %v1009, %v1054
        %v1056 = vpop.f32.mrf.mxu0
        %1057 = vdwg.mxu0
        %vm1058 = vcmp.ge.s32.totalorder %v704, 64
        %vm1059 = vcmp.lt.s32.totalorder %v704, 96
        %vm1060 = vmand %vm1058, %vm1059
        %v1061 = vtanh.pop %v1055
        %v1062 = vxor.u32 %v1055, 2147483648
        %v1063 = vmul.f32 %v1062, 1.442695
        %v1064 = vpow.pop %v1063
        %v1065 = vadd.f32 %v1064, 1.0
        %v1066 = vrcp.pop %v1065
        %v1067 = vmul.f32 %v1065, %v1066
        %v1068 = vsub.f32 1.0, %v1067
        %v1069 = vmul.f32 %v1066, %v1068
        %v1070 = vadd.f32 %v1066, %v1069
        %vm1071 = vweird.f32 %v1065
        %vm1072 = vweird.f32 %v1066
        %vm1073 = vmor %vm1071, %vm1072
        %v1074 = vsel %vm1073, %v1066, %v1070
        %v1075 = vand.u32 2147483647, %v1065
        %vm1076 = vcmp.eq.f32.partialorder %v1075, 8.507059e+37
        %v1077 = vand.u32 %v1065, 2147483648
        %v1078 = vor.u32 1.1754944e-38, %v1077
        %v1079 = vsel %vm1076, %v1078, %v1074
        %v1080 = vmul.f32 1.0, %v1079
        %v1081 = vsel %vm1060, %v1061, %v1080
        %1083 = vrot.lane.b32.xlu0 %v566, 32
        %v1084 = vpop.permute.xlu0 %1083
        %v1086 = vmul.f32 %v1081, %v1084
        %1088 = vrot.lane.b32.xlu0 %v1081, 64
        %v1089 = vpop.permute.xlu0 %1088
        %v1091 = vmul.f32 %v1081, %v1089
        %1093 = vrot.lane.b32.xlu0 %v1091, 32
        %v1094 = vpop.permute.xlu0 %1093
        %v1096 = vadd.f32 %v1086, %v1094
        %v1097 = vtanh.pop %v1096
        %1099 = vrot.lane.b32.xlu0 %v1097, 64
        %v1100 = vpop.permute.xlu0 %1099
        %v1102 = vmul.f32 %v1081, %v1100
        %1104 = vrot.lane.b32.xlu0 %v1102, 32
        %v1105 = vpop.permute.xlu0 %1104
        %1107 = vst.msk [vmem:[#allocation2] sm:$0xff] %vm593, %v1105
        %1109 = vrot.lane.b32.xlu0 %v1096, 96
        %v1110 = vpop.permute.xlu0 %1109
        %1112 = vst.msk [vmem:[#allocation3] sm:$0xff] %vm593, %v1110
        %1113 = vst.msk [vmem:[#allocation16] sm:$0xff] %vm593, %v1105
        %1114 = vst.msk [vmem:[#allocation17] sm:$0xff] %vm593, %v1110
        %v1115 = vpack.c.bf16 %v1102, %v1102
        %v1116 = vld [vmem:[%s9] sm:$0xf]
        %v1117 = vld [vmem:[%s9 + $0x4] sm:$0xf]
        %v1118 = vld [vmem:[%s9 + $0x8] sm:$0xf]
        %v1119 = vld [vmem:[%s9 + $0xc] sm:$0xf]
        %v1120 = vld [vmem:[%s10] sm:$0x1]
        %v1122 = vperm.slane %v1120, 0
        %1125 = vrot.lane.b32.xlu0 %v1115, 32
        %v1126 = vpop.permute.xlu0 %1125
        %v1131 = vunpack.c.l.b16 %v1116
        %v1132 = vunpack.c.l.b16 %v1117
        %v1133 = vunpack.c.l.b16 %v1118
        %v1134 = vunpack.c.l.b16 %v1119
        %v1135 = vpack.c.b16 %v1132, %v1131
        %v1136 = vpack.c.b16 %v1134, %v1133
        %v1140 = vsel %vm593, %v1126, 0
        %1142 = vmatpush.bf16.msra.mxu0 0
        %1143 = vmatpush.bf16.msra.mxu0 0
        %1144 = vmatpush.bf16.msra.mxu0 0
        %1145 = vmatpush.bf16.msra.mxu0 0
        %1146 = vmatpush.bf16.msra.mxu0 0
        %1147 = vmatpush.bf16.msra.mxu0 0
        %1148 = vmatpush.bf16.msra.mxu0 %v1136
        %1149 = vmatpush.bf16.msra.mxu0 %v1135
        %1150 = vmatmul.bf16.gmra.mxu0 %v1140
        %v1151 = vpop.f32.mrf.mxu0
        %v1152 = vadd.f32 %v1122, %v1151
        %v1153 = vpop.f32.mrf.mxu0
        %1154 = vdwg.mxu0
        %vm1155 = vcmask 326656
        %v1156 = vsel %vm1155, %v1152, -inf
        %1157 = vmax.xlane.f32.xlu0 %v1156
        %v1158 = vpop.xlane.xlu0 %1157
        %v1159 = vsub.f32 %v1152, %v1158
        %v1160 = vmul.f32 %v1159, 1.442695
        %v1161 = vpow.pop %v1160
        %v1162 = vsel %vm1155, %v1161, 0.0
        %1163 = vadd.xlane.f32.xlu0 %v1162
        %v1164 = vpop.xlane.xlu0 %1163
        %v1165 = vlog2.pop %v1164
        %v1166 = vmul.f32 %v1165, 0.6931472
        %v1167 = vsub.f32 %v1159, %v1166
        %1168 = vst.msk [vmem:[%s543] sm:$0xff] %vm1155, %v1167
        %s1169 = sand.u32 %s282, 1
        %s1170 = scalar_lea.sflag [#allocation6], %s1169
        %s1171 = sand.u32 %s282, 1
        %s1172 = smul.addr %s1171, 8
        %s1173 = scalar_lea.vmem [#allocation13], %s1172
        %s1174 = sand.u32 %s38, 1
        %s1175 = scalar_lea.sflag [#allocation15], %s1174
        %s1176 = sand.u32 %s308, 1
        %s1177 = smul.addr %s1176, 8
        %s1178 = scalar_lea.vmem [#allocation14], %s1177
        // Predicated region
        $region89: #{tpu_custom_call.1} parent=63 // pred_check
          %p1179 = pneg %p292
        $region90: #{tpu_custom_call.1} parent=63 // pred_check_branch
          %1181 = sbr.rel (%p1179) target = $region92
        $region91: #{tpu_custom_call.1} parent=63 // pred_region
          %1183 = vsyncadd %s1170, 0
          %s1184 = smul.addr %s38, 8
          %s1185 = scalar_lea.hbm %s11, %s1184
          %s1187 = sshll.u32 %s1173, 4
          %s1188 = int_to_ptr.vmem [resolvable:$true] %s1187
          %s1189 = sshll.u32 %s1185, 4
          %s1190 = int_to_ptr.hbm [resolvable:$true] %s1189
          %1192 = dma.vmem_to_hbm [thread:$0]  %s1188, 128, %s1190, %s1170
        $region92: #{tpu_custom_call.1} parent=63 // pred_fallthru
          _
        // Predicated region
        $region93: #{tpu_custom_call.1} parent=63 // pred_check
          %p1193 = pneg %p318
        $region94: #{tpu_custom_call.1} parent=63 // pred_check_branch
          %1195 = sbr.rel (%p1193) target = $region96
        $region95: #{tpu_custom_call.1} parent=63 // pred_region
          %1197 = vsyncadd %s1175, 0
          %s1198 = smul.addr %s38, 8
          %s1199 = scalar_lea.hbm %s12, %s1198
          %s1201 = sshll.u32 %s1178, 4
          %s1202 = int_to_ptr.vmem [resolvable:$true] %s1201
          %s1203 = sshll.u32 %s1199, 4
          %s1204 = int_to_ptr.hbm [resolvable:$true] %s1203
          %1206 = dma.vmem_to_hbm [thread:$0]  %s1202, 128, %s1204, %s1175
        $region96: #{tpu_custom_call.1} parent=63 // pred_fallthru
          _
        // Predicated region
        $region97: #{tpu_custom_call.1} parent=63 // pred_check
          %p1207 = pneg %p339
        $region98: #{tpu_custom_call.1} parent=63 // pred_check_branch
          %1209 = sbr.rel (%p1207) target = $region100
        $region99: #{tpu_custom_call.1} parent=63 // pred_region
          %1211 = vsyncadd [#allocation15], 0
          %s1213 = sshll.u32 [#allocation16], 4
          %s1214 = int_to_ptr.vmem [resolvable:$true] %s1213
          %s1215 = sshll.u32 %s13, 4
          %s1216 = int_to_ptr.hbm [resolvable:$true] %s1215
          %1218 = dma.vmem_to_hbm [thread:$0]  %s1214, 128, %s1216, [#allocation15]
        $region100: #{tpu_custom_call.1} parent=63 // pred_fallthru
          _
        // Predicated region
        $region101: #{tpu_custom_call.1} parent=63 // pred_check
          %p1219 = pneg %p360
        $region102: #{tpu_custom_call.1} parent=63 // pred_check_branch
          %1221 = sbr.rel (%p1219) target = $region104
        $region103: #{tpu_custom_call.1} parent=63 // pred_region
          %1223 = vsyncadd [#allocation18], 0
          %s1225 = sshll.u32 [#allocation17], 4
          %s1226 = int_to_ptr.vmem [resolvable:$true] %s1225
          %s1227 = sshll.u32 %s14, 4
          %s1228 = int_to_ptr.hbm [resolvable:$true] %s1227
          %1230 = dma.vmem_to_hbm [thread:$0]  %s1226, 128, %s1228, [#allocation18]
        $region104: #{tpu_custom_call.1} parent=63 // pred_fallthru
          _
        // Predicated region
        $region105: #{tpu_custom_call.1} parent=63 // pred_check
          %p1231 = pneg %p339
        $region106: #{tpu_custom_call.1} parent=63 // pred_check_branch
          %1233 = sbr.rel (%p1231) target = $region108
        $region107: #{tpu_custom_call.1} parent=63 // pred_region
          %1235 = dma.done [#allocation15], 128
        $region108: #{tpu_custom_call.1} parent=63 // pred_fallthru
          _
        // Predicated region
        $region109: #{tpu_custom_call.1} parent=63 // pred_check
          %p1236 = pneg %p360
        $region110: #{tpu_custom_call.1} parent=63 // pred_check_branch
          %1238 = sbr.rel (%p1236) target = $region112
        $region111: #{tpu_custom_call.1} parent=63 // pred_region
          %1240 = dma.done [#allocation18], 128
        $region112: #{tpu_custom_call.1} parent=63 // pred_fallthru
          _
      $region64: #{tpu_custom_call.1} parent=5 // pred_fallthru
        _
      %p1241 = scmp.le.s32.totalorder 2, %s33
      // Predicated region
      $region113: #{tpu_custom_call.1} parent=5 // pred_check
        %p1242 = pneg %p1241
      $region114: #{tpu_custom_call.1} parent=5 // pred_check_branch
        %1244 = sbr.rel (%p1242) target = $region116
      $region115: #{tpu_custom_call.1} parent=5 // pred_region
        %s1245 = ssub.s32 %s33, 2
        // Predicated region
        $region117: #{tpu_custom_call.1} parent=115 // pred_check
          %p1246 = pneg %p298
        $region118: #{tpu_custom_call.1} parent=115 // pred_check_branch
          %1248 = sbr.rel (%p1246) target = $region120
        $region119: #{tpu_custom_call.1} parent=115 // pred_region
          %s1249 = sand.u32 %s283, 1
          %s1250 = scalar_lea.sflag [#allocation6], %s1249
          %s1251 = sand.u32 %s283, 1
          %s1252 = smul.addr %s1251, 8
          %s1253 = scalar_lea.vmem [#allocation13], %s1252
          %1255 = dma.done %s1250, 128
        $region120: #{tpu_custom_call.1} parent=115 // pred_fallthru
          _
        // Predicated region
        $region121: #{tpu_custom_call.1} parent=115 // pred_check
          %p1256 = pneg %p324
        $region122: #{tpu_custom_call.1} parent=115 // pred_check_branch
          %1258 = sbr.rel (%p1256) target = $region124
        $region123: #{tpu_custom_call.1} parent=115 // pred_region
          %s1259 = sand.u32 %s39, 1
          %s1260 = scalar_lea.sflag [#allocation15], %s1259
          %s1261 = sand.u32 %s309, 1
          %s1262 = smul.addr %s1261, 8
          %s1263 = scalar_lea.vmem [#allocation14], %s1262
          %1265 = dma.done %s1260, 128
        $region124: #{tpu_custom_call.1} parent=115 // pred_fallthru
          _
      $region116: #{tpu_custom_call.1} parent=5 // pred_fallthru
        _
    $region6: #{tpu_custom_call.1} parent=1 // loop_footer
      %s37 = sadd.s32 1, %s33
    $region7: #{tpu_custom_call.1} parent=1 // loop_footer_branch
      %32 = sbr.rel target = $region3
    $region8: #{tpu_custom_call.1} parent=1 // loop_exit
      _
    %1266 = vsyncpa [#allocation5], 1
    %s1267 = scalar_lea.sflag [#allocation5], 1
    %1268 = vsyncpa %s1267, 1
    %1269 = vsyncpa [#allocation8], 1
    %1270 = vsyncpa [#allocation11], 1
    %1271 = vsyncpa [#allocation6], 1
    %s1272 = scalar_lea.sflag [#allocation6], 1
    %1273 = vsyncpa %s1272, 1
    %1274 = vsyncpa [#allocation15], 1
    %s1275 = scalar_lea.sflag [#allocation15], 1
    %1276 = vsyncpa %s1275, 1
    %1277 = vsyncpa [#allocation18], 1

</llo_original>
